<compile_context>
chip_gen: v7x
topology: tpu7x:2x2x1
jax: 0.10.0
libtpu: 0.0.40
codegen_flags: <defaults>
</compile_context>

<pallas_src>
import functools

import jax
import jax.numpy as jnp
from jax.experimental import pallas as pl
from jax.experimental.pallas import tpu as pltpu

KSIZE = 3  # 3x3 convs, padding=1 (same as the PyTorch module)


# ----------------------------------------------------------------------------
# Geometry of the flat, zero-padded scratch used for the in-kernel conv.
# ----------------------------------------------------------------------------
def _pad_geometry(W, HW):
    # Lane-aligned margins >= W+1 on both sides: the data-region store stays
    # 128-aligned, the scratch width is a multiple of 128 (unmasked zero-fill),
    # and every 3x3 tap is a contiguous width-HW window whose out-of-image rows
    # read the zeroed margins (the conv's zero padding).
    margin = ((W + 1 + 127) // 128) * 128
    padhw = margin + HW + margin
    return margin, padhw


def _sigmoid(x):
    # logistic(x) == 0.5*tanh(0.5*x)+0.5 ; tanh runs on the (otherwise idle)
    # EUP slot and avoids the VPU divide of an exp-based sigmoid.
    return 0.5 * jnp.tanh(0.5 * x) + 0.5


# ----------------------------------------------------------------------------
# Fused kernel: all ConvLSTM layers + base generator, one batch element / step.
# ----------------------------------------------------------------------------
def _fused_kernel(x_ref, h_ref, c_ref, w_ref, b_ref, wb_ref, bb_ref,
                  out_ref, cnext_ref, pad_ref, col_ref,
                  *, H, W, hidden_dim, num_layers, slot, mm_dtype):
    HW = H * W
    Ch = hidden_dim
    Cin = x_ref.shape[1]
    Ctot = Cin + Ch
    margin_l, _ = _pad_geometry(W, HW)
    data = slice(margin_l, margin_l + HW)

    # Zero both scratches once per batch element.  pad_ref's flat margins on
    # both sides implement the conv's zero padding (never written afterwards);
    # col_ref's unused slot rows stay zero so the padded weight columns see 0.
    pad_ref[...] = jnp.zeros_like(pad_ref)
    col_ref[...] = jnp.zeros_like(col_ref)

    # Column-wrap masks (kill window reads that cross a row boundary), computed
    # once and reused for every layer and tap.
    col = jax.lax.broadcasted_iota(jnp.int32, (1, HW), 1) % W
    not_first_col = (col != 0).astype(jnp.float32)      # tap dj == -1
    not_last_col = (col != W - 1).astype(jnp.float32)   # tap dj == +1

    def conv3x3(n_ch, w, bias):
        """3x3 same-conv of the activation currently stored in pad_ref[0:n_ch].

        Copies the 9 shifted tap windows into slot-aligned rows of col_ref and
        runs ONE (Cout, 9*slot) x (9*slot, HW) MXU matmul (all taps — and for
        the LSTM all four gates — fused); output is (Cout, HW) lane-dense.
        """
        for ki in range(KSIZE):
            for kj in range(KSIZE):
                t = ki * KSIZE + kj
                start = margin_l + (ki - 1) * W + (kj - 1)
                win = pad_ref[0:n_ch, start:start + HW]        # (n_ch, HW)
                if kj == 0:
                    win = win * not_first_col
                elif kj == 2:
                    win = win * not_last_col
                col_ref[t * slot:t * slot + n_ch, :] = win     # 8-aligned slot
        return jnp.dot(w.astype(mm_dtype), col_ref[...].astype(mm_dtype),
                       preferred_element_type=jnp.float32) + bias   # bias: (Cout, 1)

    x_cur = x_ref[0].astype(jnp.float32)                        # (Cin, HW)

    for l in range(num_layers):                                 # static unroll
        c_cur = c_ref[l, 0]                                     # (Ch, HW)
        pad_ref[0:Cin, data] = x_cur                            # cat([x, h])
        pad_ref[Cin:Ctot, data] = h_ref[l, 0]
        gates = conv3x3(Ctot, w_ref[l], b_ref[l])               # (4*Ch, HW)
        i_g = _sigmoid(gates[0:Ch])
        f_g = _sigmoid(gates[Ch:2 * Ch])
        o_g = _sigmoid(gates[2 * Ch:3 * Ch])
        g_g = jnp.tanh(gates[3 * Ch:4 * Ch])
        c_next = f_g * c_cur + i_g * g_g
        h_next = o_g * jnp.tanh(c_next)
        cnext_ref[l, 0] = c_next
        x_cur = h_next                                          # feed next layer

    # Base generator stand-in: 3x3 conv -> tanh.
    # TODO(synk): base_generator is an externally injected nn.Module in the
    # reference; a full AnimeGAN generator body is out of scope here.
    pad_ref[0:Ch, data] = x_cur
    y = conv3x3(Ch, wb_ref[...], bb_ref[...])
    out_ref[0] = jnp.tanh(y)


# ----------------------------------------------------------------------------
# One-time weight packing (hoisted out of the per-forward path).
# ----------------------------------------------------------------------------
def _pack_conv_slots(w, slot):
    """PyTorch (O, I, 3, 3) conv weight -> (O, 9*slot) tap-slot packed weight.

    Column t*slot + c (tap t = ki*3+kj, channel c) holds w[:, c, ki, kj]; the
    slot-padding columns [I, slot) are zero so stale im2col rows contribute 0.
    """
    O, I, kh, kw = w.shape
    assert kh == KSIZE and kw == KSIZE
    wt = jnp.transpose(w, (2, 3, 1, 0)).reshape(KSIZE * KSIZE, I, O)
    wt = jnp.pad(wt, ((0, 0), (0, slot - I), (0, 0)))
    return jnp.transpose(wt.reshape(KSIZE * KSIZE * slot, O), (1, 0))


def pack_params(params):
    ctot = params['lstm'][0][0].shape[1]           # input_dim + hidden_dim
    slot = ((ctot + 7) // 8) * 8                   # 8-aligned rows per tap
    lw = jnp.stack([_pack_conv_slots(w, slot) for w, _ in params['lstm']])
    lb = jnp.stack([b.reshape(-1, 1) for _, b in params['lstm']])
    wb, bb = params['base']
    return {
        'lstm_w': lw.astype(jnp.float32),                      # (L, 4*Ch, 9*slot)
        'lstm_b': lb.astype(jnp.float32),                      # (L, 4*Ch, 1)
        'base_w': _pack_conv_slots(wb, slot).astype(jnp.float32),  # (Cout, 9*slot)
        'base_b': bb.reshape(-1, 1).astype(jnp.float32),
    }


# ----------------------------------------------------------------------------
# Module forward — mirrors AnimeGANGeneratorTemporal.forward
# ----------------------------------------------------------------------------
def anime_gan_generator_temporal_forward(packed, x, prev_states=None,
                                         mm_dtype=jnp.float32):
    """x: (B, 3, H, W) float32 NCHW; prev_states: list of (h, c) NCHW or None.
    Returns (output (B, Cout, H, W), [c_next_layer_i (B, hidden, H, W)]) —
    like the reference, only c_next is stored per layer."""
    B, Cin, H, W = x.shape
    HW = H * W
    L, four_ch, k_packed = packed['lstm_w'].shape
    slot = k_packed // (KSIZE * KSIZE)
    Ch = four_ch // 4
    Cout = packed['base_w'].shape[0]
    assert Ch == Cin and Cin + Ch <= slot, \
        "stacked ConvLSTM layers require hidden_dim == input channels (3)"

    x_flat = x.reshape(B, Cin, HW).astype(jnp.float32)          # NCHW flatten: no transpose
    if prev_states is None:
        h_prev = jnp.zeros((L, B, Ch, HW), jnp.float32)
        c_prev = jnp.zeros((L, B, Ch, HW), jnp.float32)
    else:
        h_prev = jnp.stack([h.reshape(B, Ch, HW) for h, _ in prev_states]).astype(jnp.float32)
        c_prev = jnp.stack([c.reshape(B, Ch, HW) for _, c in prev_states]).astype(jnp.float32)

    _, padhw = _pad_geometry(W, HW)
    pad_rows = ((Cin + Ch + 7) // 8) * 8

    kernel = functools.partial(_fused_kernel, H=H, W=W, hidden_dim=Ch,
                               num_layers=L, slot=slot, mm_dtype=mm_dtype)

    # TODO(synk): for production image sizes, add an HW-tiled grid axis with a
    # 1-row halo instead of whole-image blocks (VMEM budget on v7x is 64 MiB).
    out_flat, c_next = pl.pallas_call(
        kernel,
        out_shape=(jax.ShapeDtypeStruct((B, Cout, HW), jnp.float32),
                   jax.ShapeDtypeStruct((L, B, Ch, HW), jnp.float32)),
        grid=(B,),
        in_specs=[
            pl.BlockSpec((1, Cin, HW), lambda b: (b, 0, 0)),                     # x
            pl.BlockSpec((L, 1, Ch, HW), lambda b: (0, b, 0, 0)),                # h_prev
            pl.BlockSpec((L, 1, Ch, HW), lambda b: (0, b, 0, 0)),                # c_prev
            pl.BlockSpec((L, four_ch, k_packed), lambda b: (0, 0, 0)),           # lstm_w
            pl.BlockSpec((L, four_ch, 1), lambda b: (0, 0, 0)),                  # lstm_b
            pl.BlockSpec((Cout, k_packed), lambda b: (0, 0)),                    # base_w
            pl.BlockSpec((Cout, 1), lambda b: (0, 0)),                           # base_b
        ],
        out_specs=(
            pl.BlockSpec((1, Cout, HW), lambda b: (b, 0, 0)),
            pl.BlockSpec((L, 1, Ch, HW), lambda b: (0, b, 0, 0)),
        ),
        scratch_shapes=[pltpu.VMEM((pad_rows, padhw), jnp.float32),       # padded image
                        pltpu.VMEM((KSIZE * KSIZE * slot, HW), jnp.float32)],  # im2col
        compiler_params=pltpu.CompilerParams(
            dimension_semantics=("parallel",),          # batch=2 -> both v7x TCs
            vmem_limit_bytes=32 * 1024 * 1024),
    )(x_flat, h_prev, c_prev, packed['lstm_w'], packed['lstm_b'],
      packed['base_w'], packed['base_b'])

    output = out_flat.reshape(B, Cout, H, W)
    # Bug-for-bug: `x, new_state = layer(...)` stores only c_next per layer.
    current_states = [c_next[l].reshape(B, Ch, H, W) for l in range(L)]
    return output, current_states


# ----------------------------------------------------------------------------
# Deterministic parameter init (shapes match the PyTorch module's __init__)
# ----------------------------------------------------------------------------
def init_params(key, hidden_dim, num_lstm_layers, input_dim=3, out_channels=3):
    params = {'lstm': [], 'base': None}
    keys = jax.random.split(key, 2 * num_lstm_layers + 2)
    for i in range(num_lstm_layers):
        cin = input_dim + hidden_dim
        cout = 4 * hidden_dim
        w = jax.random.normal(keys[2 * i], (cout, cin, KSIZE, KSIZE), jnp.float32) * 0.1
        b = jax.random.normal(keys[2 * i + 1], (cout,), jnp.float32) * 0.1
        params['lstm'].append((w, b))
    wb = jax.random.normal(keys[-2], (out_channels, hidden_dim, KSIZE, KSIZE), jnp.float32) * 0.1
    bb = jax.random.normal(keys[-1], (out_channels,), jnp.float32) * 0.1
    params['base'] = (wb, bb)
    return params


# ----------------------------------------------------------------------------
# Pure-JAX reference (lax.conv) for correctness checks
# ----------------------------------------------------------------------------
def _ref_conv(x, w, b):
    y = jax.lax.conv_general_dilated(x, w, (1, 1), ((1, 1), (1, 1)),
                                     dimension_numbers=('NCHW', 'OIHW', 'NCHW'))
    return y + b[None, :, None, None]


def reference_forward(params, x, prev_states=None):
    B, _, H, W = x.shape
    hidden_dim = params['lstm'][0][1].shape[0] // 4
    if prev_states is None:
        z = jnp.zeros((B, hidden_dim, H, W), jnp.float32)
        prev_states = [(z, z) for _ in params['lstm']]
    states = []
    for (w, b), (h, c) in zip(params['lstm'], prev_states):
        out = _ref_conv(jnp.concatenate([x, h], axis=1), w, b)
        cc_i, cc_f, cc_o, cc_g = jnp.split(out, 4, axis=1)
        i = jax.nn.sigmoid(cc_i)
        f = jax.nn.sigmoid(cc_f)
        o = jax.nn.sigmoid(cc_o)
        g = jnp.tanh(cc_g)
        c_next = f * c + i * g
        h_next = o * jnp.tanh(c_next)
        x = h_next
        states.append(c_next)
    wb, bb = params['base']
    return jnp.tanh(_ref_conv(x, wb, bb)), states


if __name__ == "__main__":
    key = jax.random.PRNGKey(0)
    # hidden_dim must equal the input channel count (3) for the stacked
    # ConvLSTM layers to be shape-consistent (see note at top of file).
    hidden_dim = 3
    num_lstm_layers = 2
    B, C, H, W = 2, 3, 16, 16

    pkey, xkey, skey = jax.random.split(key, 3)
    params = init_params(pkey, hidden_dim, num_lstm_layers)
    packed = pack_params(params)          # hoisted one-time weight flattening
    x = jax.random.normal(xkey, (B, C, H, W), jnp.float32)

    fwd = jax.jit(anime_gan_generator_temporal_forward,
                  static_argnames=("mm_dtype",))

    # 1) default (zero) previous states, f32 matmuls
    out, states = fwd(packed, x, None)
    out = jax.block_until_ready(out)
    ref_out, ref_states = reference_forward(params, x)
    assert jnp.allclose(out, ref_out, atol=1e-2, rtol=1e-2), "output mismatch vs reference"
    for s, rs in zip(states, ref_states):
        assert jnp.allclose(s, rs, atol=1e-2, rtol=1e-2), "state mismatch vs reference"

    # 2) explicit non-zero previous states (exercises the prev_states path)
    sk = jax.random.split(skey, 2 * num_lstm_layers)
    prev_states = [
        (0.5 * jax.random.normal(sk[2 * i], (B, hidden_dim, H, W), jnp.float32),
         0.5 * jax.random.normal(sk[2 * i + 1], (B, hidden_dim, H, W), jnp.float32))
        for i in range(num_lstm_layers)]
    out2, states2 = fwd(packed, x, prev_states)
    out2 = jax.block_until_ready(out2)
    ref_out2, ref_states2 = reference_forward(params, x, prev_states)
    assert jnp.allclose(out2, ref_out2, atol=1e-2, rtol=1e-2), "output mismatch (prev_states)"
    for s, rs in zip(states2, ref_states2):
        assert jnp.allclose(s, rs, atol=1e-2, rtol=1e-2), "state mismatch (prev_states)"

    # 3) bf16 matmul path (halves the dominant matmul-input bytes on v6e/v7x;
    #    elementwise gate math stays in f32)
    out3, states3 = fwd(packed, x, None, mm_dtype=jnp.bfloat16)
    out3 = jax.block_until_ready(out3)
    assert jnp.allclose(out3, ref_out, atol=5e-2, rtol=5e-2), "bf16 output mismatch"

    print("KERNEL_OK")
</pallas_src>

<mosaic_0001>
module attributes {stable_mosaic.version = 11 : i64} {
  func.func @_fused_kernel(%arg0: i32, %arg1: memref<1x3x256xf32, #tpu.memory_space<vmem>>, %arg2: memref<2x1x3x256xf32, #tpu.memory_space<vmem>>, %arg3: memref<2x1x3x256xf32, #tpu.memory_space<vmem>>, %arg4: memref<2x12x72xf32, #tpu.memory_space<vmem>>, %arg5: memref<2x12x1xf32, #tpu.memory_space<vmem>>, %arg6: memref<3x72xf32, #tpu.memory_space<vmem>>, %arg7: memref<3x1xf32, #tpu.memory_space<vmem>>, %arg8: memref<1x3x256xf32, #tpu.memory_space<vmem>>, %arg9: memref<2x1x3x256xf32, #tpu.memory_space<vmem>>, %arg10: memref<8x512xf32, #tpu.memory_space<vmem>>, %arg11: memref<72x256xf32, #tpu.memory_space<vmem>>) attributes {dimension_semantics = [#tpu.dimension_semantics<parallel>], iteration_bounds = array<i64: 2>, scalar_prefetch = 0 : i64, scratch_operands = 2 : i64, tpu.core_type = #tpu.core_type<tc>, window_params = [{transform_indices = @transform_0, window_bounds = array<i64: 1, 3, 256>}, {transform_indices = @transform_1, window_bounds = array<i64: 2, 1, 3, 256>}, {transform_indices = @transform_2, window_bounds = array<i64: 2, 1, 3, 256>}, {pipeline_mode = #tpu.pipeline_mode<synchronous>, transform_indices = @transform_3, window_bounds = array<i64: 2, 12, 72>}, {pipeline_mode = #tpu.pipeline_mode<synchronous>, transform_indices = @transform_4, window_bounds = array<i64: 2, 12, 1>}, {pipeline_mode = #tpu.pipeline_mode<synchronous>, transform_indices = @transform_5, window_bounds = array<i64: 3, 72>}, {pipeline_mode = #tpu.pipeline_mode<synchronous>, transform_indices = @transform_6, window_bounds = array<i64: 3, 1>}, {transform_indices = @transform_7, window_bounds = array<i64: 1, 3, 256>}, {transform_indices = @transform_8, window_bounds = array<i64: 2, 1, 3, 256>}]} {
    %cst = arith.constant 0.000000e+00 : f32
    %0 = vector.broadcast %cst : f32 to vector<8x512xf32>
    %c0 = arith.constant 0 : index
    %c0_0 = arith.constant 0 : index
    %1 = vector.load %arg10[%c0, %c0_0] : memref<8x512xf32, #tpu.memory_space<vmem>>, vector<8x512xf32>
    tpu.vector_store %arg10[%c0, %c0_0], %0 {strides = array<i32>} : memref<8x512xf32, #tpu.memory_space<vmem>>, vector<8x512xf32>,
    %cst_1 = arith.constant 0.000000e+00 : f32
    %2 = vector.broadcast %cst_1 : f32 to vector<72x256xf32>
    %c0_2 = arith.constant 0 : index
    %c0_3 = arith.constant 0 : index
    %3 = vector.load %arg11[%c0_2, %c0_3] : memref<72x256xf32, #tpu.memory_space<vmem>>, vector<72x256xf32>
    tpu.vector_store %arg11[%c0_2, %c0_3], %2 {strides = array<i32>} : memref<72x256xf32, #tpu.memory_space<vmem>>, vector<72x256xf32>,
    %4 = tpu.iota {dimensions = array<i32: 1>} : vector<1x256xi32>
    %c16_i32 = arith.constant 16 : i32
    %c0_i32 = arith.constant 0 : i32
    %5 = arith.cmpi eq, %c16_i32, %c0_i32 : i32
    %c1_i32 = arith.constant 1 : i32
    %6 = arith.select %5, %c1_i32, %c16_i32 : i32
    %7 = vector.broadcast %6 : i32 to vector<1x256xi32>
    %8 = arith.remsi %4, %7 : vector<1x256xi32>
    %c0_i32_4 = arith.constant 0 : i32
    %9 = vector.broadcast %c0_i32_4 : i32 to vector<1x256xi32>
    %10 = arith.cmpi ne, %8, %9 : vector<1x256xi32>
    %c0_i32_5 = arith.constant 0 : i32
    %11 = vector.broadcast %c0_i32_5 : i32 to vector<1x256xi32>
    %12 = arith.cmpi slt, %8, %11 : vector<1x256xi32>
    %c0_i32_6 = arith.constant 0 : i32
    %13 = arith.cmpi slt, %6, %c0_i32_6 : i32
    %14 = vector.broadcast %13 : i1 to vector<1x256xi1>
    %15 = vector.broadcast %14 : vector<1x256xi1> to vector<1x256xi1>
    %16 = arith.xori %12, %15 : vector<1x256xi1>
    %17 = arith.andi %16, %10 : vector<1x256xi1>
    %18 = vector.broadcast %6 : i32 to vector<1x256xi32>
    %19 = arith.addi %8, %18 : vector<1x256xi32>
    %20 = arith.select %17, %19, %8 : vector<1x256xi1>, vector<1x256xi32>
    %c0_i32_7 = arith.constant 0 : i32
    %21 = vector.broadcast %c0_i32_7 : i32 to vector<1x256xi32>
    %22 = arith.cmpi ne, %20, %21 : vector<1x256xi32>
    %23 = arith.extui %22 : vector<1x256xi1> to vector<1x256xi32>
    %24 = arith.sitofp %23 : vector<1x256xi32> to vector<1x256xf32>
    %c15_i32 = arith.constant 15 : i32
    %25 = vector.broadcast %c15_i32 : i32 to vector<1x256xi32>
    %26 = arith.cmpi ne, %20, %25 : vector<1x256xi32>
    %27 = arith.extui %26 : vector<1x256xi1> to vector<1x256xi32>
    %28 = arith.sitofp %27 : vector<1x256xi32> to vector<1x256xf32>
    %c0_8 = arith.constant 0 : index
    %c0_9 = arith.constant 0 : index
    %c0_10 = arith.constant 0 : index
    %29 = vector.load %arg1[%c0_8, %c0_9, %c0_10] : memref<1x3x256xf32, #tpu.memory_space<vmem>>, vector<1x3x256xf32>
    %30 = vector.shape_cast %29 : vector<1x3x256xf32> to vector<3x256xf32>
    %c0_11 = arith.constant 0 : index
    %c0_12 = arith.constant 0 : index
    %c0_13 = arith.constant 0 : index
    %c0_14 = arith.constant 0 : index
    %31 = vector.load %arg3[%c0_11, %c0_12, %c0_13, %c0_14] : memref<2x1x3x256xf32, #tpu.memory_space<vmem>>, vector<1x1x3x256xf32>
    %32 = vector.shape_cast %31 : vector<1x1x3x256xf32> to vector<3x256xf32>
    %c0_15 = arith.constant 0 : index
    %c128 = arith.constant 128 : index
    %33 = vector.load %arg10[%c0_15, %c128] : memref<8x512xf32, #tpu.memory_space<vmem>>, vector<3x256xf32>
    tpu.vector_store %arg10[%c0_15, %c128], %30 {strides = array<i32>} : memref<8x512xf32, #tpu.memory_space<vmem>>, vector<3x256xf32>,
    %c0_16 = arith.constant 0 : index
    %c0_17 = arith.constant 0 : index
    %c0_18 = arith.constant 0 : index
    %c0_19 = arith.constant 0 : index
    %34 = vector.load %arg2[%c0_16, %c0_17, %c0_18, %c0_19] : memref<2x1x3x256xf32, #tpu.memory_space<vmem>>, vector<1x1x3x256xf32>
    %35 = vector.shape_cast %34 : vector<1x1x3x256xf32> to vector<3x256xf32>
    %c3 = arith.constant 3 : index
    %c128_20 = arith.constant 128 : index
    %36 = vector.load %arg10[%c3, %c128_20] : memref<8x512xf32, #tpu.memory_space<vmem>>, vector<3x256xf32>
    tpu.vector_store %arg10[%c3, %c128_20], %35 {strides = array<i32>} : memref<8x512xf32, #tpu.memory_space<vmem>>, vector<3x256xf32>,
    %c0_21 = arith.constant 0 : index
    %c0_22 = arith.constant 0 : index
    %c0_23 = arith.constant 0 : index
    %37 = vector.load %arg4[%c0_21, %c0_22, %c0_23] : memref<2x12x72xf32, #tpu.memory_space<vmem>>, vector<1x12x72xf32>
    %38 = vector.shape_cast %37 : vector<1x12x72xf32> to vector<12x72xf32>
    %c0_24 = arith.constant 0 : index
    %c0_25 = arith.constant 0 : index
    %c0_26 = arith.constant 0 : index
    %39 = vector.load %arg5[%c0_24, %c0_25, %c0_26] : memref<2x12x1xf32, #tpu.memory_space<vmem>>, vector<1x12x1xf32>
    %40 = vector.shape_cast %39 : vector<1x12x1xf32> to vector<12x1xf32>
    %c0_27 = arith.constant 0 : index
    %c111 = arith.constant 111 : index
    %41 = vector.load %arg10[%c0_27, %c111] : memref<8x512xf32, #tpu.memory_space<vmem>>, vector<6x256xf32>
    %42 = vector.broadcast %24 : vector<1x256xf32> to vector<6x256xf32>
    %43 = arith.mulf %41, %42 : vector<6x256xf32>
    %c0_28 = arith.constant 0 : index
    %c0_29 = arith.constant 0 : index
    %44 = vector.load %arg11[%c0_28, %c0_29] : memref<72x256xf32, #tpu.memory_space<vmem>>, vector<6x256xf32>
    tpu.vector_store %arg11[%c0_28, %c0_29], %43 {strides = array<i32>} : memref<72x256xf32, #tpu.memory_space<vmem>>, vector<6x256xf32>,
    %c0_30 = arith.constant 0 : index
    %c112 = arith.constant 112 : index
    %45 = vector.load %arg10[%c0_30, %c112] : memref<8x512xf32, #tpu.memory_space<vmem>>, vector<6x256xf32>
    %c8 = arith.constant 8 : index
    %c0_31 = arith.constant 0 : index
    %46 = vector.load %arg11[%c8, %c0_31] : memref<72x256xf32, #tpu.memory_space<vmem>>, vector<6x256xf32>
    tpu.vector_store %arg11[%c8, %c0_31], %45 {strides = array<i32>} : memref<72x256xf32, #tpu.memory_space<vmem>>, vector<6x256xf32>,
    %c0_32 = arith.constant 0 : index
    %c113 = arith.constant 113 : index
    %47 = vector.load %arg10[%c0_32, %c113] : memref<8x512xf32, #tpu.memory_space<vmem>>, vector<6x256xf32>
    %48 = vector.broadcast %28 : vector<1x256xf32> to vector<6x256xf32>
    %49 = arith.mulf %47, %48 : vector<6x256xf32>
    %c16 = arith.constant 16 : index
    %c0_33 = arith.constant 0 : index
    %50 = vector.load %arg11[%c16, %c0_33] : memref<72x256xf32, #tpu.memory_space<vmem>>, vector<6x256xf32>
    tpu.vector_store %arg11[%c16, %c0_33], %49 {strides = array<i32>} : memref<72x256xf32, #tpu.memory_space<vmem>>, vector<6x256xf32>,
    %c0_34 = arith.constant 0 : index
    %c127 = arith.constant 127 : index
    %51 = vector.load %arg10[%c0_34, %c127] : memref<8x512xf32, #tpu.memory_space<vmem>>, vector<6x256xf32>
    %52 = vector.broadcast %24 : vector<1x256xf32> to vector<6x256xf32>
    %53 = arith.mulf %51, %52 : vector<6x256xf32>
    %c24 = arith.constant 24 : index
    %c0_35 = arith.constant 0 : index
    %54 = vector.load %arg11[%c24, %c0_35] : memref<72x256xf32, #tpu.memory_space<vmem>>, vector<6x256xf32>
    tpu.vector_store %arg11[%c24, %c0_35], %53 {strides = array<i32>} : memref<72x256xf32, #tpu.memory_space<vmem>>, vector<6x256xf32>,
    %c0_36 = arith.constant 0 : index
    %c128_37 = arith.constant 128 : index
    %55 = vector.load %arg10[%c0_36, %c128_37] : memref<8x512xf32, #tpu.memory_space<vmem>>, vector<6x256xf32>
    %c32 = arith.constant 32 : index
    %c0_38 = arith.constant 0 : index
    %56 = vector.load %arg11[%c32, %c0_38] : memref<72x256xf32, #tpu.memory_space<vmem>>, vector<6x256xf32>
    tpu.vector_store %arg11[%c32, %c0_38], %55 {strides = array<i32>} : memref<72x256xf32, #tpu.memory_space<vmem>>, vector<6x256xf32>,
    %c0_39 = arith.constant 0 : index
    %c129 = arith.constant 129 : index
    %57 = vector.load %arg10[%c0_39, %c129] : memref<8x512xf32, #tpu.memory_space<vmem>>, vector<6x256xf32>
    %58 = vector.broadcast %28 : vector<1x256xf32> to vector<6x256xf32>
    %59 = arith.mulf %57, %58 : vector<6x256xf32>
    %c40 = arith.constant 40 : index
    %c0_40 = arith.constant 0 : index
    %60 = vector.load %arg11[%c40, %c0_40] : memref<72x256xf32, #tpu.memory_space<vmem>>, vector<6x256xf32>
    tpu.vector_store %arg11[%c40, %c0_40], %59 {strides = array<i32>} : memref<72x256xf32, #tpu.memory_space<vmem>>, vector<6x256xf32>,
    %c0_41 = arith.constant 0 : index
    %c143 = arith.constant 143 : index
    %61 = vector.load %arg10[%c0_41, %c143] : memref<8x512xf32, #tpu.memory_space<vmem>>, vector<6x256xf32>
    %62 = vector.broadcast %24 : vector<1x256xf32> to vector<6x256xf32>
    %63 = arith.mulf %61, %62 : vector<6x256xf32>
    %c48 = arith.constant 48 : index
    %c0_42 = arith.constant 0 : index
    %64 = vector.load %arg11[%c48, %c0_42] : memref<72x256xf32, #tpu.memory_space<vmem>>, vector<6x256xf32>
    tpu.vector_store %arg11[%c48, %c0_42], %63 {strides = array<i32>} : memref<72x256xf32, #tpu.memory_space<vmem>>, vector<6x256xf32>,
    %c0_43 = arith.constant 0 : index
    %c144 = arith.constant 144 : index
    %65 = vector.load %arg10[%c0_43, %c144] : memref<8x512xf32, #tpu.memory_space<vmem>>, vector<6x256xf32>
    %c56 = arith.constant 56 : index
    %c0_44 = arith.constant 0 : index
    %66 = vector.load %arg11[%c56, %c0_44] : memref<72x256xf32, #tpu.memory_space<vmem>>, vector<6x256xf32>
    tpu.vector_store %arg11[%c56, %c0_44], %65 {strides = array<i32>} : memref<72x256xf32, #tpu.memory_space<vmem>>, vector<6x256xf32>,
    %c0_45 = arith.constant 0 : index
    %c145 = arith.constant 145 : index
    %67 = vector.load %arg10[%c0_45, %c145] : memref<8x512xf32, #tpu.memory_space<vmem>>, vector<6x256xf32>
    %68 = vector.broadcast %28 : vector<1x256xf32> to vector<6x256xf32>
    %69 = arith.mulf %67, %68 : vector<6x256xf32>
    %c64 = arith.constant 64 : index
    %c0_46 = arith.constant 0 : index
    %70 = vector.load %arg11[%c64, %c0_46] : memref<72x256xf32, #tpu.memory_space<vmem>>, vector<6x256xf32>
    tpu.vector_store %arg11[%c64, %c0_46], %69 {strides = array<i32>} : memref<72x256xf32, #tpu.memory_space<vmem>>, vector<6x256xf32>,
    %c0_47 = arith.constant 0 : index
    %c0_48 = arith.constant 0 : index
    %71 = vector.load %arg11[%c0_47, %c0_48] : memref<72x256xf32, #tpu.memory_space<vmem>>, vector<72x256xf32>
    %cst_49 = arith.constant dense<0.000000e+00> : vector<12x256xf32>
    %72 = tpu.matmul %38, %71, %cst_49 {dimension_numbers = #tpu.dot_dimension_numbers<[1], [0], [0], [1], [0, 0, 1, 1], [], []>} : vector<12x72xf32>, vector<72x256xf32>, vector<12x256xf32> -> vector<12x256xf32>
    %73 = vector.broadcast %40 : vector<12x1xf32> to vector<12x256xf32>
    %74 = arith.addf %72, %73 : vector<12x256xf32>
    %75 = vector.extract_strided_slice %74 {offsets = [0, 0], sizes = [3, 256], strides = [1, 1]} : vector<12x256xf32> to vector<3x256xf32>
    %cst_50 = arith.constant 5.000000e-01 : f32
    %76 = vector.broadcast %cst_50 : f32 to vector<3x256xf32>
    %77 = arith.mulf %76, %75 : vector<3x256xf32>
    %78 = math.tanh %77 : vector<3x256xf32>
    %cst_51 = arith.constant 5.000000e-01 : f32
    %79 = vector.broadcast %cst_51 : f32 to vector<3x256xf32>
    %80 = arith.mulf %79, %78 : vector<3x256xf32>
    %cst_52 = arith.constant 5.000000e-01 : f32
    %81 = vector.broadcast %cst_52 : f32 to vector<3x256xf32>
    %82 = arith.addf %80, %81 : vector<3x256xf32>
    %83 = vector.extract_strided_slice %74 {offsets = [3, 0], sizes = [3, 256], strides = [1, 1]} : vector<12x256xf32> to vector<3x256xf32>
    %cst_53 = arith.constant 5.000000e-01 : f32
    %84 = vector.broadcast %cst_53 : f32 to vector<3x256xf32>
    %85 = arith.mulf %84, %83 : vector<3x256xf32>
    %86 = math.tanh %85 : vector<3x256xf32>
    %cst_54 = arith.constant 5.000000e-01 : f32
    %87 = vector.broadcast %cst_54 : f32 to vector<3x256xf32>
    %88 = arith.mulf %87, %86 : vector<3x256xf32>
    %cst_55 = arith.constant 5.000000e-01 : f32
    %89 = vector.broadcast %cst_55 : f32 to vector<3x256xf32>
    %90 = arith.addf %88, %89 : vector<3x256xf32>
    %91 = vector.extract_strided_slice %74 {offsets = [6, 0], sizes = [3, 256], strides = [1, 1]} : vector<12x256xf32> to vector<3x256xf32>
    %cst_56 = arith.constant 5.000000e-01 : f32
    %92 = vector.broadcast %cst_56 : f32 to vector<3x256xf32>
    %93 = arith.mulf %92, %91 : vector<3x256xf32>
    %94 = math.tanh %93 : vector<3x256xf32>
    %cst_57 = arith.constant 5.000000e-01 : f32
    %95 = vector.broadcast %cst_57 : f32 to vector<3x256xf32>
    %96 = arith.mulf %95, %94 : vector<3x256xf32>
    %cst_58 = arith.constant 5.000000e-01 : f32
    %97 = vector.broadcast %cst_58 : f32 to vector<3x256xf32>
    %98 = arith.addf %96, %97 : vector<3x256xf32>
    %99 = vector.extract_strided_slice %74 {offsets = [9, 0], sizes = [3, 256], strides = [1, 1]} : vector<12x256xf32> to vector<3x256xf32>
    %100 = math.tanh %99 : vector<3x256xf32>
    %101 = arith.mulf %90, %32 : vector<3x256xf32>
    %102 = arith.mulf %82, %100 : vector<3x256xf32>
    %103 = arith.addf %101, %102 : vector<3x256xf32>
    %104 = math.tanh %103 : vector<3x256xf32>
    %105 = arith.mulf %98, %104 : vector<3x256xf32>
    %c0_59 = arith.constant 0 : index
    %c0_60 = arith.constant 0 : index
    %c0_61 = arith.constant 0 : index
    %c0_62 = arith.constant 0 : index
    %106 = vector.load %arg9[%c0_59, %c0_60, %c0_61, %c0_62] : memref<2x1x3x256xf32, #tpu.memory_space<vmem>>, vector<1x1x3x256xf32>
    %107 = vector.shape_cast %106 : vector<1x1x3x256xf32> to vector<3x256xf32>
    %108 = vector.shape_cast %103 : vector<3x256xf32> to vector<1x1x3x256xf32>
    tpu.vector_store %arg9[%c0_59, %c0_60, %c0_61, %c0_62], %108 {strides = array<i32>} : memref<2x1x3x256xf32, #tpu.memory_space<vmem>>, vector<1x1x3x256xf32>,
    %c1 = arith.constant 1 : index
    %c0_63 = arith.constant 0 : index
    %c0_64 = arith.constant 0 : index
    %c0_65 = arith.constant 0 : index
    %109 = vector.load %arg3[%c1, %c0_63, %c0_64, %c0_65] : memref<2x1x3x256xf32, #tpu.memory_space<vmem>>, vector<1x1x3x256xf32>
    %110 = vector.shape_cast %109 : vector<1x1x3x256xf32> to vector<3x256xf32>
    %c0_66 = arith.constant 0 : index
    %c128_67 = arith.constant 128 : index
    %111 = vector.load %arg10[%c0_66, %c128_67] : memref<8x512xf32, #tpu.memory_space<vmem>>, vector<3x256xf32>
    tpu.vector_store %arg10[%c0_66, %c128_67], %105 {strides = array<i32>} : memref<8x512xf32, #tpu.memory_space<vmem>>, vector<3x256xf32>,
    %c1_68 = arith.constant 1 : index
    %c0_69 = arith.constant 0 : index
    %c0_70 = arith.constant 0 : index
    %c0_71 = arith.constant 0 : index
    %112 = vector.load %arg2[%c1_68, %c0_69, %c0_70, %c0_71] : memref<2x1x3x256xf32, #tpu.memory_space<vmem>>, vector<1x1x3x256xf32>
    %113 = vector.shape_cast %112 : vector<1x1x3x256xf32> to vector<3x256xf32>
    %c3_72 = arith.constant 3 : index
    %c128_73 = arith.constant 128 : index
    %114 = vector.load %arg10[%c3_72, %c128_73] : memref<8x512xf32, #tpu.memory_space<vmem>>, vector<3x256xf32>
    tpu.vector_store %arg10[%c3_72, %c128_73], %113 {strides = array<i32>} : memref<8x512xf32, #tpu.memory_space<vmem>>, vector<3x256xf32>,
    %c1_74 = arith.constant 1 : index
    %c0_75 = arith.constant 0 : index
    %c0_76 = arith.constant 0 : index
    %115 = vector.load %arg4[%c1_74, %c0_75, %c0_76] : memref<2x12x72xf32, #tpu.memory_space<vmem>>, vector<1x12x72xf32>
    %116 = vector.shape_cast %115 : vector<1x12x72xf32> to vector<12x72xf32>
    %c1_77 = arith.constant 1 : index
    %c0_78 = arith.constant 0 : index
    %c0_79 = arith.constant 0 : index
    %117 = vector.load %arg5[%c1_77, %c0_78, %c0_79] : memref<2x12x1xf32, #tpu.memory_space<vmem>>, vector<1x12x1xf32>
    %118 = vector.shape_cast %117 : vector<1x12x1xf32> to vector<12x1xf32>
    %c0_80 = arith.constant 0 : index
    %c111_81 = arith.constant 111 : index
    %119 = vector.load %arg10[%c0_80, %c111_81] : memref<8x512xf32, #tpu.memory_space<vmem>>, vector<6x256xf32>
    %120 = vector.broadcast %24 : vector<1x256xf32> to vector<6x256xf32>
    %121 = arith.mulf %119, %120 : vector<6x256xf32>
    %c0_82 = arith.constant 0 : index
    %c0_83 = arith.constant 0 : index
    %122 = vector.load %arg11[%c0_82, %c0_83] : memref<72x256xf32, #tpu.memory_space<vmem>>, vector<6x256xf32>
    tpu.vector_store %arg11[%c0_82, %c0_83], %121 {strides = array<i32>} : memref<72x256xf32, #tpu.memory_space<vmem>>, vector<6x256xf32>,
    %c0_84 = arith.constant 0 : index
    %c112_85 = arith.constant 112 : index
    %123 = vector.load %arg10[%c0_84, %c112_85] : memref<8x512xf32, #tpu.memory_space<vmem>>, vector<6x256xf32>
    %c8_86 = arith.constant 8 : index
    %c0_87 = arith.constant 0 : index
    %124 = vector.load %arg11[%c8_86, %c0_87] : memref<72x256xf32, #tpu.memory_space<vmem>>, vector<6x256xf32>
    tpu.vector_store %arg11[%c8_86, %c0_87], %123 {strides = array<i32>} : memref<72x256xf32, #tpu.memory_space<vmem>>, vector<6x256xf32>,
    %c0_88 = arith.constant 0 : index
    %c113_89 = arith.constant 113 : index
    %125 = vector.load %arg10[%c0_88, %c113_89] : memref<8x512xf32, #tpu.memory_space<vmem>>, vector<6x256xf32>
    %126 = vector.broadcast %28 : vector<1x256xf32> to vector<6x256xf32>
    %127 = arith.mulf %125, %126 : vector<6x256xf32>
    %c16_90 = arith.constant 16 : index
    %c0_91 = arith.constant 0 : index
    %128 = vector.load %arg11[%c16_90, %c0_91] : memref<72x256xf32, #tpu.memory_space<vmem>>, vector<6x256xf32>
    tpu.vector_store %arg11[%c16_90, %c0_91], %127 {strides = array<i32>} : memref<72x256xf32, #tpu.memory_space<vmem>>, vector<6x256xf32>,
    %c0_92 = arith.constant 0 : index
    %c127_93 = arith.constant 127 : index
    %129 = vector.load %arg10[%c0_92, %c127_93] : memref<8x512xf32, #tpu.memory_space<vmem>>, vector<6x256xf32>
    %130 = vector.broadcast %24 : vector<1x256xf32> to vector<6x256xf32>
    %131 = arith.mulf %129, %130 : vector<6x256xf32>
    %c24_94 = arith.constant 24 : index
    %c0_95 = arith.constant 0 : index
    %132 = vector.load %arg11[%c24_94, %c0_95] : memref<72x256xf32, #tpu.memory_space<vmem>>, vector<6x256xf32>
    tpu.vector_store %arg11[%c24_94, %c0_95], %131 {strides = array<i32>} : memref<72x256xf32, #tpu.memory_space<vmem>>, vector<6x256xf32>,
    %c0_96 = arith.constant 0 : index
    %c128_97 = arith.constant 128 : index
    %133 = vector.load %arg10[%c0_96, %c128_97] : memref<8x512xf32, #tpu.memory_space<vmem>>, vector<6x256xf32>
    %c32_98 = arith.constant 32 : index
    %c0_99 = arith.constant 0 : index
    %134 = vector.load %arg11[%c32_98, %c0_99] : memref<72x256xf32, #tpu.memory_space<vmem>>, vector<6x256xf32>
    tpu.vector_store %arg11[%c32_98, %c0_99], %133 {strides = array<i32>} : memref<72x256xf32, #tpu.memory_space<vmem>>, vector<6x256xf32>,
    %c0_100 = arith.constant 0 : index
    %c129_101 = arith.constant 129 : index
    %135 = vector.load %arg10[%c0_100, %c129_101] : memref<8x512xf32, #tpu.memory_space<vmem>>, vector<6x256xf32>
    %136 = vector.broadcast %28 : vector<1x256xf32> to vector<6x256xf32>
    %137 = arith.mulf %135, %136 : vector<6x256xf32>
    %c40_102 = arith.constant 40 : index
    %c0_103 = arith.constant 0 : index
    %138 = vector.load %arg11[%c40_102, %c0_103] : memref<72x256xf32, #tpu.memory_space<vmem>>, vector<6x256xf32>
    tpu.vector_store %arg11[%c40_102, %c0_103], %137 {strides = array<i32>} : memref<72x256xf32, #tpu.memory_space<vmem>>, vector<6x256xf32>,
    %c0_104 = arith.constant 0 : index
    %c143_105 = arith.constant 143 : index
    %139 = vector.load %arg10[%c0_104, %c143_105] : memref<8x512xf32, #tpu.memory_space<vmem>>, vector<6x256xf32>
    %140 = vector.broadcast %24 : vector<1x256xf32> to vector<6x256xf32>
    %141 = arith.mulf %139, %140 : vector<6x256xf32>
    %c48_106 = arith.constant 48 : index
    %c0_107 = arith.constant 0 : index
    %142 = vector.load %arg11[%c48_106, %c0_107] : memref<72x256xf32, #tpu.memory_space<vmem>>, vector<6x256xf32>
    tpu.vector_store %arg11[%c48_106, %c0_107], %141 {strides = array<i32>} : memref<72x256xf32, #tpu.memory_space<vmem>>, vector<6x256xf32>,
    %c0_108 = arith.constant 0 : index
    %c144_109 = arith.constant 144 : index
    %143 = vector.load %arg10[%c0_108, %c144_109] : memref<8x512xf32, #tpu.memory_space<vmem>>, vector<6x256xf32>
    %c56_110 = arith.constant 56 : index
    %c0_111 = arith.constant 0 : index
    %144 = vector.load %arg11[%c56_110, %c0_111] : memref<72x256xf32, #tpu.memory_space<vmem>>, vector<6x256xf32>
    tpu.vector_store %arg11[%c56_110, %c0_111], %143 {strides = array<i32>} : memref<72x256xf32, #tpu.memory_space<vmem>>, vector<6x256xf32>,
    %c0_112 = arith.constant 0 : index
    %c145_113 = arith.constant 145 : index
    %145 = vector.load %arg10[%c0_112, %c145_113] : memref<8x512xf32, #tpu.memory_space<vmem>>, vector<6x256xf32>
    %146 = vector.broadcast %28 : vector<1x256xf32> to vector<6x256xf32>
    %147 = arith.mulf %145, %146 : vector<6x256xf32>
    %c64_114 = arith.constant 64 : index
    %c0_115 = arith.constant 0 : index
    %148 = vector.load %arg11[%c64_114, %c0_115] : memref<72x256xf32, #tpu.memory_space<vmem>>, vector<6x256xf32>
    tpu.vector_store %arg11[%c64_114, %c0_115], %147 {strides = array<i32>} : memref<72x256xf32, #tpu.memory_space<vmem>>, vector<6x256xf32>,
    %c0_116 = arith.constant 0 : index
    %c0_117 = arith.constant 0 : index
    %149 = vector.load %arg11[%c0_116, %c0_117] : memref<72x256xf32, #tpu.memory_space<vmem>>, vector<72x256xf32>
    %cst_118 = arith.constant dense<0.000000e+00> : vector<12x256xf32>
    %150 = tpu.matmul %116, %149, %cst_118 {dimension_numbers = #tpu.dot_dimension_numbers<[1], [0], [0], [1], [0, 0, 1, 1], [], []>} : vector<12x72xf32>, vector<72x256xf32>, vector<12x256xf32> -> vector<12x256xf32>
    %151 = vector.broadcast %118 : vector<12x1xf32> to vector<12x256xf32>
    %152 = arith.addf %150, %151 : vector<12x256xf32>
    %153 = vector.extract_strided_slice %152 {offsets = [0, 0], sizes = [3, 256], strides = [1, 1]} : vector<12x256xf32> to vector<3x256xf32>
    %cst_119 = arith.constant 5.000000e-01 : f32
    %154 = vector.broadcast %cst_119 : f32 to vector<3x256xf32>
    %155 = arith.mulf %154, %153 : vector<3x256xf32>
    %156 = math.tanh %155 : vector<3x256xf32>
    %cst_120 = arith.constant 5.000000e-01 : f32
    %157 = vector.broadcast %cst_120 : f32 to vector<3x256xf32>
    %158 = arith.mulf %157, %156 : vector<3x256xf32>
    %cst_121 = arith.constant 5.000000e-01 : f32
    %159 = vector.broadcast %cst_121 : f32 to vector<3x256xf32>
    %160 = arith.addf %158, %159 : vector<3x256xf32>
    %161 = vector.extract_strided_slice %152 {offsets = [3, 0], sizes = [3, 256], strides = [1, 1]} : vector<12x256xf32> to vector<3x256xf32>
    %cst_122 = arith.constant 5.000000e-01 : f32
    %162 = vector.broadcast %cst_122 : f32 to vector<3x256xf32>
    %163 = arith.mulf %162, %161 : vector<3x256xf32>
    %164 = math.tanh %163 : vector<3x256xf32>
    %cst_123 = arith.constant 5.000000e-01 : f32
    %165 = vector.broadcast %cst_123 : f32 to vector<3x256xf32>
    %166 = arith.mulf %165, %164 : vector<3x256xf32>
    %cst_124 = arith.constant 5.000000e-01 : f32
    %167 = vector.broadcast %cst_124 : f32 to vector<3x256xf32>
    %168 = arith.addf %166, %167 : vector<3x256xf32>
    %169 = vector.extract_strided_slice %152 {offsets = [6, 0], sizes = [3, 256], strides = [1, 1]} : vector<12x256xf32> to vector<3x256xf32>
    %cst_125 = arith.constant 5.000000e-01 : f32
    %170 = vector.broadcast %cst_125 : f32 to vector<3x256xf32>
    %171 = arith.mulf %170, %169 : vector<3x256xf32>
    %172 = math.tanh %171 : vector<3x256xf32>
    %cst_126 = arith.constant 5.000000e-01 : f32
    %173 = vector.broadcast %cst_126 : f32 to vector<3x256xf32>
    %174 = arith.mulf %173, %172 : vector<3x256xf32>
    %cst_127 = arith.constant 5.000000e-01 : f32
    %175 = vector.broadcast %cst_127 : f32 to vector<3x256xf32>
    %176 = arith.addf %174, %175 : vector<3x256xf32>
    %177 = vector.extract_strided_slice %152 {offsets = [9, 0], sizes = [3, 256], strides = [1, 1]} : vector<12x256xf32> to vector<3x256xf32>
    %178 = math.tanh %177 : vector<3x256xf32>
    %179 = arith.mulf %168, %110 : vector<3x256xf32>
    %180 = arith.mulf %160, %178 : vector<3x256xf32>
    %181 = arith.addf %179, %180 : vector<3x256xf32>
    %182 = math.tanh %181 : vector<3x256xf32>
    %183 = arith.mulf %176, %182 : vector<3x256xf32>
    %c1_128 = arith.constant 1 : index
    %c0_129 = arith.constant 0 : index
    %c0_130 = arith.constant 0 : index
    %c0_131 = arith.constant 0 : index
    %184 = vector.load %arg9[%c1_128, %c0_129, %c0_130, %c0_131] : memref<2x1x3x256xf32, #tpu.memory_space<vmem>>, vector<1x1x3x256xf32>
    %185 = vector.shape_cast %184 : vector<1x1x3x256xf32> to vector<3x256xf32>
    %186 = vector.shape_cast %181 : vector<3x256xf32> to vector<1x1x3x256xf32>
    tpu.vector_store %arg9[%c1_128, %c0_129, %c0_130, %c0_131], %186 {strides = array<i32>} : memref<2x1x3x256xf32, #tpu.memory_space<vmem>>, vector<1x1x3x256xf32>,
    %c0_132 = arith.constant 0 : index
    %c128_133 = arith.constant 128 : index
    %187 = vector.load %arg10[%c0_132, %c128_133] : memref<8x512xf32, #tpu.memory_space<vmem>>, vector<3x256xf32>
    tpu.vector_store %arg10[%c0_132, %c128_133], %183 {strides = array<i32>} : memref<8x512xf32, #tpu.memory_space<vmem>>, vector<3x256xf32>,
    %c0_134 = arith.constant 0 : index
    %c0_135 = arith.constant 0 : index
    %188 = vector.load %arg6[%c0_134, %c0_135] : memref<3x72xf32, #tpu.memory_space<vmem>>, vector<3x72xf32>
    %c0_136 = arith.constant 0 : index
    %c0_137 = arith.constant 0 : index
    %189 = vector.load %arg7[%c0_136, %c0_137] : memref<3x1xf32, #tpu.memory_space<vmem>>, vector<3x1xf32>
    %c0_138 = arith.constant 0 : index
    %c111_139 = arith.constant 111 : index
    %190 = vector.load %arg10[%c0_138, %c111_139] : memref<8x512xf32, #tpu.memory_space<vmem>>, vector<3x256xf32>
    %191 = vector.broadcast %24 : vector<1x256xf32> to vector<3x256xf32>
    %192 = arith.mulf %190, %191 : vector<3x256xf32>
    %c0_140 = arith.constant 0 : index
    %c0_141 = arith.constant 0 : index
    %193 = vector.load %arg11[%c0_140, %c0_141] : memref<72x256xf32, #tpu.memory_space<vmem>>, vector<3x256xf32>
    tpu.vector_store %arg11[%c0_140, %c0_141], %192 {strides = array<i32>} : memref<72x256xf32, #tpu.memory_space<vmem>>, vector<3x256xf32>,
    %c0_142 = arith.constant 0 : index
    %c112_143 = arith.constant 112 : index
    %194 = vector.load %arg10[%c0_142, %c112_143] : memref<8x512xf32, #tpu.memory_space<vmem>>, vector<3x256xf32>
    %c8_144 = arith.constant 8 : index
    %c0_145 = arith.constant 0 : index
    %195 = vector.load %arg11[%c8_144, %c0_145] : memref<72x256xf32, #tpu.memory_space<vmem>>, vector<3x256xf32>
    tpu.vector_store %arg11[%c8_144, %c0_145], %194 {strides = array<i32>} : memref<72x256xf32, #tpu.memory_space<vmem>>, vector<3x256xf32>,
    %c0_146 = arith.constant 0 : index
    %c113_147 = arith.constant 113 : index
    %196 = vector.load %arg10[%c0_146, %c113_147] : memref<8x512xf32, #tpu.memory_space<vmem>>, vector<3x256xf32>
    %197 = vector.broadcast %28 : vector<1x256xf32> to vector<3x256xf32>
    %198 = arith.mulf %196, %197 : vector<3x256xf32>
    %c16_148 = arith.constant 16 : index
    %c0_149 = arith.constant 0 : index
    %199 = vector.load %arg11[%c16_148, %c0_149] : memref<72x256xf32, #tpu.memory_space<vmem>>, vector<3x256xf32>
    tpu.vector_store %arg11[%c16_148, %c0_149], %198 {strides = array<i32>} : memref<72x256xf32, #tpu.memory_space<vmem>>, vector<3x256xf32>,
    %c0_150 = arith.constant 0 : index
    %c127_151 = arith.constant 127 : index
    %200 = vector.load %arg10[%c0_150, %c127_151] : memref<8x512xf32, #tpu.memory_space<vmem>>, vector<3x256xf32>
    %201 = vector.broadcast %24 : vector<1x256xf32> to vector<3x256xf32>
    %202 = arith.mulf %200, %201 : vector<3x256xf32>
    %c24_152 = arith.constant 24 : index
    %c0_153 = arith.constant 0 : index
    %203 = vector.load %arg11[%c24_152, %c0_153] : memref<72x256xf32, #tpu.memory_space<vmem>>, vector<3x256xf32>
    tpu.vector_store %arg11[%c24_152, %c0_153], %202 {strides = array<i32>} : memref<72x256xf32, #tpu.memory_space<vmem>>, vector<3x256xf32>,
    %c0_154 = arith.constant 0 : index
    %c128_155 = arith.constant 128 : index
    %204 = vector.load %arg10[%c0_154, %c128_155] : memref<8x512xf32, #tpu.memory_space<vmem>>, vector<3x256xf32>
    %c32_156 = arith.constant 32 : index
    %c0_157 = arith.constant 0 : index
    %205 = vector.load %arg11[%c32_156, %c0_157] : memref<72x256xf32, #tpu.memory_space<vmem>>, vector<3x256xf32>
    tpu.vector_store %arg11[%c32_156, %c0_157], %204 {strides = array<i32>} : memref<72x256xf32, #tpu.memory_space<vmem>>, vector<3x256xf32>,
    %c0_158 = arith.constant 0 : index
    %c129_159 = arith.constant 129 : index
    %206 = vector.load %arg10[%c0_158, %c129_159] : memref<8x512xf32, #tpu.memory_space<vmem>>, vector<3x256xf32>
    %207 = vector.broadcast %28 : vector<1x256xf32> to vector<3x256xf32>
    %208 = arith.mulf %206, %207 : vector<3x256xf32>
    %c40_160 = arith.constant 40 : index
    %c0_161 = arith.constant 0 : index
    %209 = vector.load %arg11[%c40_160, %c0_161] : memref<72x256xf32, #tpu.memory_space<vmem>>, vector<3x256xf32>
    tpu.vector_store %arg11[%c40_160, %c0_161], %208 {strides = array<i32>} : memref<72x256xf32, #tpu.memory_space<vmem>>, vector<3x256xf32>,
    %c0_162 = arith.constant 0 : index
    %c143_163 = arith.constant 143 : index
    %210 = vector.load %arg10[%c0_162, %c143_163] : memref<8x512xf32, #tpu.memory_space<vmem>>, vector<3x256xf32>
    %211 = vector.broadcast %24 : vector<1x256xf32> to vector<3x256xf32>
    %212 = arith.mulf %210, %211 : vector<3x256xf32>
    %c48_164 = arith.constant 48 : index
    %c0_165 = arith.constant 0 : index
    %213 = vector.load %arg11[%c48_164, %c0_165] : memref<72x256xf32, #tpu.memory_space<vmem>>, vector<3x256xf32>
    tpu.vector_store %arg11[%c48_164, %c0_165], %212 {strides = array<i32>} : memref<72x256xf32, #tpu.memory_space<vmem>>, vector<3x256xf32>,
    %c0_166 = arith.constant 0 : index
    %c144_167 = arith.constant 144 : index
    %214 = vector.load %arg10[%c0_166, %c144_167] : memref<8x512xf32, #tpu.memory_space<vmem>>, vector<3x256xf32>
    %c56_168 = arith.constant 56 : index
    %c0_169 = arith.constant 0 : index
    %215 = vector.load %arg11[%c56_168, %c0_169] : memref<72x256xf32, #tpu.memory_space<vmem>>, vector<3x256xf32>
    tpu.vector_store %arg11[%c56_168, %c0_169], %214 {strides = array<i32>} : memref<72x256xf32, #tpu.memory_space<vmem>>, vector<3x256xf32>,
    %c0_170 = arith.constant 0 : index
    %c145_171 = arith.constant 145 : index
    %216 = vector.load %arg10[%c0_170, %c145_171] : memref<8x512xf32, #tpu.memory_space<vmem>>, vector<3x256xf32>
    %217 = vector.broadcast %28 : vector<1x256xf32> to vector<3x256xf32>
    %218 = arith.mulf %216, %217 : vector<3x256xf32>
    %c64_172 = arith.constant 64 : index
    %c0_173 = arith.constant 0 : index
    %219 = vector.load %arg11[%c64_172, %c0_173] : memref<72x256xf32, #tpu.memory_space<vmem>>, vector<3x256xf32>
    tpu.vector_store %arg11[%c64_172, %c0_173], %218 {strides = array<i32>} : memref<72x256xf32, #tpu.memory_space<vmem>>, vector<3x256xf32>,
    %c0_174 = arith.constant 0 : index
    %c0_175 = arith.constant 0 : index
    %220 = vector.load %arg11[%c0_174, %c0_175] : memref<72x256xf32, #tpu.memory_space<vmem>>, vector<72x256xf32>
    %cst_176 = arith.constant dense<0.000000e+00> : vector<3x256xf32>
    %221 = tpu.matmul %188, %220, %cst_176 {dimension_numbers = #tpu.dot_dimension_numbers<[1], [0], [0], [1], [0, 0, 1, 1], [], []>} : vector<3x72xf32>, vector<72x256xf32>, vector<3x256xf32> -> vector<3x256xf32>
    %222 = vector.broadcast %189 : vector<3x1xf32> to vector<3x256xf32>
    %223 = arith.addf %221, %222 : vector<3x256xf32>
    %224 = math.tanh %223 : vector<3x256xf32>
    %c0_177 = arith.constant 0 : index
    %c0_178 = arith.constant 0 : index
    %c0_179 = arith.constant 0 : index
    %225 = vector.load %arg8[%c0_177, %c0_178, %c0_179] : memref<1x3x256xf32, #tpu.memory_space<vmem>>, vector<1x3x256xf32>
    %226 = vector.shape_cast %225 : vector<1x3x256xf32> to vector<3x256xf32>
    %227 = vector.shape_cast %224 : vector<3x256xf32> to vector<1x3x256xf32>
    tpu.vector_store %arg8[%c0_177, %c0_178, %c0_179], %227 {strides = array<i32>} : memref<1x3x256xf32, #tpu.memory_space<vmem>>, vector<1x3x256xf32>,
    return
  }
  func.func @transform_0(%arg0: i32) -> (i32, i32, i32) {
    %c0_i32 = arith.constant 0 : i32
    %c0_i32_0 = arith.constant 0 : i32
    %c0_i32_1 = arith.constant 0 : i32
    return %arg0, %c0_i32, %c0_i32_0 : i32, i32, i32
  }
  func.func @transform_1(%arg0: i32) -> (i32, i32, i32, i32) {
    %c0_i32 = arith.constant 0 : i32
    %c0_i32_0 = arith.constant 0 : i32
    %c0_i32_1 = arith.constant 0 : i32
    %c0_i32_2 = arith.constant 0 : i32
    return %c0_i32, %arg0, %c0_i32_0, %c0_i32_1 : i32, i32, i32, i32
  }
  func.func @transform_2(%arg0: i32) -> (i32, i32, i32, i32) {
    %c0_i32 = arith.constant 0 : i32
    %c0_i32_0 = arith.constant 0 : i32
    %c0_i32_1 = arith.constant 0 : i32
    %c0_i32_2 = arith.constant 0 : i32
    return %c0_i32, %arg0, %c0_i32_0, %c0_i32_1 : i32, i32, i32, i32
  }
  func.func @transform_3(%arg0: i32) -> (i32, i32, i32) {
    %c0_i32 = arith.constant 0 : i32
    %c0_i32_0 = arith.constant 0 : i32
    %c0_i32_1 = arith.constant 0 : i32
    %c0_i32_2 = arith.constant 0 : i32
    return %c0_i32, %c0_i32_0, %c0_i32_1 : i32, i32, i32
  }
  func.func @transform_4(%arg0: i32) -> (i32, i32, i32) {
    %c0_i32 = arith.constant 0 : i32
    %c0_i32_0 = arith.constant 0 : i32
    %c0_i32_1 = arith.constant 0 : i32
    %c0_i32_2 = arith.constant 0 : i32
    return %c0_i32, %c0_i32_0, %c0_i32_1 : i32, i32, i32
  }
  func.func @transform_5(%arg0: i32) -> (i32, i32) {
    %c0_i32 = arith.constant 0 : i32
    %c0_i32_0 = arith.constant 0 : i32
    %c0_i32_1 = arith.constant 0 : i32
    return %c0_i32, %c0_i32_0 : i32, i32
  }
  func.func @transform_6(%arg0: i32) -> (i32, i32) {
    %c0_i32 = arith.constant 0 : i32
    %c0_i32_0 = arith.constant 0 : i32
    %c0_i32_1 = arith.constant 0 : i32
    return %c0_i32, %c0_i32_0 : i32, i32
  }
  func.func @transform_7(%arg0: i32) -> (i32, i32, i32) {
    %c0_i32 = arith.constant 0 : i32
    %c0_i32_0 = arith.constant 0 : i32
    %c0_i32_1 = arith.constant 0 : i32
    return %arg0, %c0_i32, %c0_i32_0 : i32, i32, i32
  }
  func.func @transform_8(%arg0: i32) -> (i32, i32, i32, i32) {
    %c0_i32 = arith.constant 0 : i32
    %c0_i32_0 = arith.constant 0 : i32
    %c0_i32_1 = arith.constant 0 : i32
    %c0_i32_2 = arith.constant 0 : i32
    return %c0_i32, %arg0, %c0_i32_0, %c0_i32_1 : i32, i32, i32, i32
  }
}

</mosaic_0001>

<llo_original>
// kernel: anime_gan_generator_temporal_forward.1
$region0: #{anime_gan_generator_temporal_forward.1}
  #allocation0 [shape = 'u32[]', space=smem, size = 0x4, offset = 0x4, fixed_abs, tag = 'smem constant byte address 0x4 - core index']
  #allocation1 [shape = 'u32[144,128]{1,0:T(1,128)}', space=vmem, size = 0x12000, scoped, tag = 'internal scratch']
  #allocation2 [shape = 'f32[8,512]{1,0:T(8,128)}', space=vmem, size = 0x4000, scoped, tag = 'scratch operand']
  #allocation3 [shape = 'f32[72,256]{1,0:T(8,128)}', space=vmem, size = 0x12000, scoped, tag = 'scratch operand']
  %s0 = inlined_call_operand.vmem [shape: f32[2,3,256], index: 0, kind: input, shape index: {}]
  %s1 = inlined_call_operand.vmem [shape: f32[2,2,3,256], index: 1, kind: input, shape index: {}, may-alias: {1,2}]
  %s2 = inlined_call_operand.vmem [shape: f32[2,2,3,256], index: 2, kind: input, shape index: {}, may-alias: {1,2}]
  %s3 = inlined_call_operand.vmem [shape: f32[2,12,72], index: 3, kind: input, shape index: {}]
  %s4 = inlined_call_operand.vmem [shape: f32[2,12,1], index: 4, kind: input, shape index: {}]
  %s5 = inlined_call_operand.vmem [shape: f32[3,72], index: 5, kind: input, shape index: {}]
  %s6 = inlined_call_operand.vmem [shape: f32[3,1], index: 6, kind: input, shape index: {}]
  %s7 = inlined_call_operand.vmem [shape: f32[2,3,256], index: 7, kind: output, shape index: {0}]
  %s8 = inlined_call_operand.vmem [shape: f32[2,2,3,256], index: 8, kind: output, shape index: {1}]
  %9 = xla_tuple %s7, %s8
  %s10 = sld [smem:[#allocation0]]
  $region179: #{anime_gan_generator_temporal_forward.1} parent=0
    _
  %s12 = ssub.s32 1, %s10
  %s13 = scalar_select 0, %s12, %s10
  $region1: #{anime_gan_generator_temporal_forward.1} parent=0
    #allocation4 [shape = 'u8[16384]{0}', space=vmem, size = 0x4000, scoped, tag = 'input window, operand 1']
    #allocation5 [shape = 'u8[16384]{0}', space=vmem, size = 0x4000, scoped, tag = 'input window, operand 2']
    #allocation6 [shape = 'u8[16384]{0}', space=vmem, size = 0x4000, scoped, tag = 'output window, operand 1']
    loop: start=0, step=1, limit=4
    $region2: #{anime_gan_generator_temporal_forward.1} parent=1 // loop_pre_header
      _
    $region3: #{anime_gan_generator_temporal_forward.1} parent=1 // loop_header
      %s15 = sphi 0, %s19
      %p16 = scmp.ge.s32.totalorder %s15, 4
      %s25 = sphi 0, %s27
      %s28 = sphi 0, %s25
      %s29 = sphi 0, %s28
      %s45 = sphi 0, %s29
      %s51 = sphi 0, %s53
      %s54 = sphi 0, %s51
      %s55 = sphi 0, %s54
      %s71 = sphi 0, %s55
      %s77 = sphi 0, %s79
      %s80 = sphi 0, %s77
      %s81 = sphi 0, %s80
      %s97 = sphi 0, %s81
      %s101 = sphi 0, %s101
      %s103 = sphi 0, %s101
      %s104 = sphi 0, %s103
      %s118 = sphi 0, %s104
      %s122 = sphi 0, %s122
      %s124 = sphi 0, %s122
      %s125 = sphi 0, %s124
      %s139 = sphi 0, %s125
      %s143 = sphi 0, %s143
      %s145 = sphi 0, %s143
      %s146 = sphi 0, %s145
      %s160 = sphi 0, %s146
      %s164 = sphi 0, %s164
      %s166 = sphi 0, %s164
      %s167 = sphi 0, %s166
      %s181 = sphi 0, %s167
      %s187 = sphi 0, %s189
      %s190 = sphi 0, %s187
      %s191 = sphi 0, %s190
      %s207 = sphi 0, %s191
      %s213 = sphi 0, %s215
      %s216 = sphi 0, %s213
      %s217 = sphi 0, %s216
      %s233 = sphi 0, %s217
    $region4: #{anime_gan_generator_temporal_forward.1} parent=1 // loop_header_branch
      %18 = sbr.rel (%p16) target = $region8
    $region5: #{anime_gan_generator_temporal_forward.1} parent=1 // loop_body
      %s20 = ssub.s32 %s15, 1
      %s21 = ssub.s32 %s15, 2
      %s22 = sadd.s32 %s15, 1
      %s23 = ssub.s32 %s15, %s22
      %p24 = scmp.eq.s32.totalorder %s23, 0
      %s26 = sadd.s32 %s25, 1
      %s27 = scalar_select %p24, %s25, %s26
      %p30 = pneg %p24
      %p31 = scmp.eq.s32.totalorder %s15, 1
      %p32 = por %p30, %p31
      %p33 = scmp.ne.s32.totalorder %s25, %s28
      %p34 = scmp.eq.s32.totalorder %s15, 0
      %p35 = por %p33, %p34
      %p36 = scmp.ne.s32.totalorder %s25, %s28
      %p37 = scmp.eq.s32.totalorder %s20, 1
      %p38 = por %p36, %p37
      %p39 = scmp.ne.s32.totalorder %s28, %s29
      %p40 = scmp.eq.s32.totalorder %s20, 0
      %p41 = por %p39, %p40
      %p42 = scmp.ne.s32.totalorder %s28, %s29
      %p43 = scmp.eq.s32.totalorder %s21, 1
      %p44 = por %p42, %p43
      %p46 = scmp.ne.s32.totalorder %s29, %s45
      %p47 = scmp.eq.s32.totalorder %s21, 0
      %p48 = por %p46, %p47
      %s49 = ssub.s32 %s15, %s22
      %p50 = scmp.eq.s32.totalorder %s49, 0
      %s52 = sadd.s32 %s51, 1
      %s53 = scalar_select %p50, %s51, %s52
      %p56 = pneg %p50
      %p57 = scmp.eq.s32.totalorder %s15, 1
      %p58 = por %p56, %p57
      %p59 = scmp.ne.s32.totalorder %s51, %s54
      %p60 = scmp.eq.s32.totalorder %s15, 0
      %p61 = por %p59, %p60
      %p62 = scmp.ne.s32.totalorder %s51, %s54
      %p63 = scmp.eq.s32.totalorder %s20, 1
      %p64 = por %p62, %p63
      %p65 = scmp.ne.s32.totalorder %s54, %s55
      %p66 = scmp.eq.s32.totalorder %s20, 0
      %p67 = por %p65, %p66
      %p68 = scmp.ne.s32.totalorder %s54, %s55
      %p69 = scmp.eq.s32.totalorder %s21, 1
      %p70 = por %p68, %p69
      %p72 = scmp.ne.s32.totalorder %s55, %s71
      %p73 = scmp.eq.s32.totalorder %s21, 0
      %p74 = por %p72, %p73
      %s75 = ssub.s32 %s15, %s22
      %p76 = scmp.eq.s32.totalorder %s75, 0
      %s78 = sadd.s32 %s77, 1
      %s79 = scalar_select %p76, %s77, %s78
      %p82 = pneg %p76
      %p83 = scmp.eq.s32.totalorder %s15, 1
      %p84 = por %p82, %p83
      %p85 = scmp.ne.s32.totalorder %s77, %s80
      %p86 = scmp.eq.s32.totalorder %s15, 0
      %p87 = por %p85, %p86
      %p88 = scmp.ne.s32.totalorder %s77, %s80
      %p89 = scmp.eq.s32.totalorder %s20, 1
      %p90 = por %p88, %p89
      %p91 = scmp.ne.s32.totalorder %s80, %s81
      %p92 = scmp.eq.s32.totalorder %s20, 0
      %p93 = por %p91, %p92
      %p94 = scmp.ne.s32.totalorder %s80, %s81
      %p95 = scmp.eq.s32.totalorder %s21, 1
      %p96 = por %p94, %p95
      %p98 = scmp.ne.s32.totalorder %s81, %s97
      %p99 = scmp.eq.s32.totalorder %s21, 0
      %p100 = por %p98, %p99
      %s102 = sadd.s32 %s101, 1
      %p105 = scmp.eq.s32.totalorder %s15, 1
      %p106 = scmp.ne.s32.totalorder %s101, %s103
      %p107 = scmp.eq.s32.totalorder %s15, 0
      %p108 = por %p106, %p107
      %p109 = scmp.ne.s32.totalorder %s101, %s103
      %p110 = scmp.eq.s32.totalorder %s20, 1
      %p111 = por %p109, %p110
      %p112 = scmp.ne.s32.totalorder %s103, %s104
      %p113 = scmp.eq.s32.totalorder %s20, 0
      %p114 = por %p112, %p113
      %p115 = scmp.ne.s32.totalorder %s103, %s104
      %p116 = scmp.eq.s32.totalorder %s21, 1
      %p117 = por %p115, %p116
      %p119 = scmp.ne.s32.totalorder %s104, %s118
      %p120 = scmp.eq.s32.totalorder %s21, 0
      %p121 = por %p119, %p120
      %s123 = sadd.s32 %s122, 1
      %p126 = scmp.eq.s32.totalorder %s15, 1
      %p127 = scmp.ne.s32.totalorder %s122, %s124
      %p128 = scmp.eq.s32.totalorder %s15, 0
      %p129 = por %p127, %p128
      %p130 = scmp.ne.s32.totalorder %s122, %s124
      %p131 = scmp.eq.s32.totalorder %s20, 1
      %p132 = por %p130, %p131
      %p133 = scmp.ne.s32.totalorder %s124, %s125
      %p134 = scmp.eq.s32.totalorder %s20, 0
      %p135 = por %p133, %p134
      %p136 = scmp.ne.s32.totalorder %s124, %s125
      %p137 = scmp.eq.s32.totalorder %s21, 1
      %p138 = por %p136, %p137
      %p140 = scmp.ne.s32.totalorder %s125, %s139
      %p141 = scmp.eq.s32.totalorder %s21, 0
      %p142 = por %p140, %p141
      %s144 = sadd.s32 %s143, 1
      %p147 = scmp.eq.s32.totalorder %s15, 1
      %p148 = scmp.ne.s32.totalorder %s143, %s145
      %p149 = scmp.eq.s32.totalorder %s15, 0
      %p150 = por %p148, %p149
      %p151 = scmp.ne.s32.totalorder %s143, %s145
      %p152 = scmp.eq.s32.totalorder %s20, 1
      %p153 = por %p151, %p152
      %p154 = scmp.ne.s32.totalorder %s145, %s146
      %p155 = scmp.eq.s32.totalorder %s20, 0
      %p156 = por %p154, %p155
      %p157 = scmp.ne.s32.totalorder %s145, %s146
      %p158 = scmp.eq.s32.totalorder %s21, 1
      %p159 = por %p157, %p158
      %p161 = scmp.ne.s32.totalorder %s146, %s160
      %p162 = scmp.eq.s32.totalorder %s21, 0
      %p163 = por %p161, %p162
      %s165 = sadd.s32 %s164, 1
      %p168 = scmp.eq.s32.totalorder %s15, 1
      %p169 = scmp.ne.s32.totalorder %s164, %s166
      %p170 = scmp.eq.s32.totalorder %s15, 0
      %p171 = por %p169, %p170
      %p172 = scmp.ne.s32.totalorder %s164, %s166
      %p173 = scmp.eq.s32.totalorder %s20, 1
      %p174 = por %p172, %p173
      %p175 = scmp.ne.s32.totalorder %s166, %s167
      %p176 = scmp.eq.s32.totalorder %s20, 0
      %p177 = por %p175, %p176
      %p178 = scmp.ne.s32.totalorder %s166, %s167
      %p179 = scmp.eq.s32.totalorder %s21, 1
      %p180 = por %p178, %p179
      %p182 = scmp.ne.s32.totalorder %s167, %s181
      %p183 = scmp.eq.s32.totalorder %s21, 0
      %p184 = por %p182, %p183
      %s185 = ssub.s32 %s15, %s22
      %p186 = scmp.eq.s32.totalorder %s185, 0
      %s188 = sadd.s32 %s187, 1
      %s189 = scalar_select %p186, %s187, %s188
      %p192 = pneg %p186
      %p193 = scmp.eq.s32.totalorder %s15, 1
      %p194 = por %p192, %p193
      %p195 = scmp.ne.s32.totalorder %s187, %s190
      %p196 = scmp.eq.s32.totalorder %s15, 0
      %p197 = por %p195, %p196
      %p198 = scmp.ne.s32.totalorder %s187, %s190
      %p199 = scmp.eq.s32.totalorder %s20, 1
      %p200 = por %p198, %p199
      %p201 = scmp.ne.s32.totalorder %s190, %s191
      %p202 = scmp.eq.s32.totalorder %s20, 0
      %p203 = por %p201, %p202
      %p204 = scmp.ne.s32.totalorder %s190, %s191
      %p205 = scmp.eq.s32.totalorder %s21, 1
      %p206 = por %p204, %p205
      %p208 = scmp.ne.s32.totalorder %s191, %s207
      %p209 = scmp.eq.s32.totalorder %s21, 0
      %p210 = por %p208, %p209
      %s211 = ssub.s32 %s15, %s22
      %p212 = scmp.eq.s32.totalorder %s211, 0
      %s214 = sadd.s32 %s213, 1
      %s215 = scalar_select %p212, %s213, %s214
      %p218 = pneg %p212
      %p219 = scmp.eq.s32.totalorder %s15, 1
      %p220 = por %p218, %p219
      %p221 = scmp.ne.s32.totalorder %s213, %s216
      %p222 = scmp.eq.s32.totalorder %s15, 0
      %p223 = por %p221, %p222
      %p224 = scmp.ne.s32.totalorder %s213, %s216
      %p225 = scmp.eq.s32.totalorder %s20, 1
      %p226 = por %p224, %p225
      %p227 = scmp.ne.s32.totalorder %s216, %s217
      %p228 = scmp.eq.s32.totalorder %s20, 0
      %p229 = por %p227, %p228
      %p230 = scmp.ne.s32.totalorder %s216, %s217
      %p231 = scmp.eq.s32.totalorder %s21, 1
      %p232 = por %p230, %p231
      %p234 = scmp.ne.s32.totalorder %s217, %s233
      %p235 = scmp.eq.s32.totalorder %s21, 0
      %p236 = por %p234, %p235
      %p237 = scmp.le.s32.totalorder 1, %s15
      %p238 = scmp.lt.s32.totalorder %s15, 3
      %p239 = pnand %p237, %p238
      %p240 = pneg %p239
      // Predicated region
      $region9: #{anime_gan_generator_temporal_forward.1} parent=5 // pred_check
        _
      $region10: #{anime_gan_generator_temporal_forward.1} parent=5 // pred_check_branch
        %242 = sbr.rel (%p239) target = $region12
      $region11: #{anime_gan_generator_temporal_forward.1} parent=5 // pred_region
        %s243 = ssub.s32 %s15, 1
        // Predicated region
        $region13: #{anime_gan_generator_temporal_forward.1} parent=11 // pred_check
          %p244 = pneg %p114
        $region14: #{anime_gan_generator_temporal_forward.1} parent=11 // pred_check_branch
          %246 = sbr.rel (%p244) target = $region16
        $region15: #{anime_gan_generator_temporal_forward.1} parent=11 // pred_region
          _
        $region16: #{anime_gan_generator_temporal_forward.1} parent=11 // pred_fallthru
          _
        // Predicated region
        $region17: #{anime_gan_generator_temporal_forward.1} parent=11 // pred_check
          %p247 = pneg %p135
        $region18: #{anime_gan_generator_temporal_forward.1} parent=11 // pred_check_branch
          %249 = sbr.rel (%p247) target = $region20
        $region19: #{anime_gan_generator_temporal_forward.1} parent=11 // pred_region
          _
        $region20: #{anime_gan_generator_temporal_forward.1} parent=11 // pred_fallthru
          _
        // Predicated region
        $region21: #{anime_gan_generator_temporal_forward.1} parent=11 // pred_check
          %p250 = pneg %p156
        $region22: #{anime_gan_generator_temporal_forward.1} parent=11 // pred_check_branch
          %252 = sbr.rel (%p250) target = $region24
        $region23: #{anime_gan_generator_temporal_forward.1} parent=11 // pred_region
          _
        $region24: #{anime_gan_generator_temporal_forward.1} parent=11 // pred_fallthru
          _
        // Predicated region
        $region25: #{anime_gan_generator_temporal_forward.1} parent=11 // pred_check
          %p253 = pneg %p177
        $region26: #{anime_gan_generator_temporal_forward.1} parent=11 // pred_check_branch
          %255 = sbr.rel (%p253) target = $region28
        $region27: #{anime_gan_generator_temporal_forward.1} parent=11 // pred_region
          _
        $region28: #{anime_gan_generator_temporal_forward.1} parent=11 // pred_fallthru
          _
      $region12: #{anime_gan_generator_temporal_forward.1} parent=5 // pred_fallthru
        _
      %p256 = scmp.lt.s32.totalorder %s15, 2
      // Predicated region
      $region29: #{anime_gan_generator_temporal_forward.1} parent=5 // pred_check
        %p257 = pneg %p256
      $region30: #{anime_gan_generator_temporal_forward.1} parent=5 // pred_check_branch
        %259 = sbr.rel (%p257) target = $region32
      $region31: #{anime_gan_generator_temporal_forward.1} parent=5 // pred_region
        // Predicated region
        $region33: #{anime_gan_generator_temporal_forward.1} parent=31 // pred_check
          %p260 = pneg %p35
        $region34: #{anime_gan_generator_temporal_forward.1} parent=31 // pred_check_branch
          %262 = sbr.rel (%p260) target = $region36
        $region35: #{anime_gan_generator_temporal_forward.1} parent=31 // pred_region
          %p263 = scmp.lt.s32.totalorder %s15, 1
          %s264 = scalar_select %p263, %s15, 1
          %s265 = smul.addr %s264, 2
          %s266 = smul.addr %s265, 4
          %s267 = scalar_lea.vmem %s0, %s266
        $region36: #{anime_gan_generator_temporal_forward.1} parent=31 // pred_fallthru
          _
        // Predicated region
        $region37: #{anime_gan_generator_temporal_forward.1} parent=31 // pred_check
          %p268 = pneg %p61
        $region38: #{anime_gan_generator_temporal_forward.1} parent=31 // pred_check_branch
          %270 = sbr.rel (%p268) target = $region40
        $region39: #{anime_gan_generator_temporal_forward.1} parent=31 // pred_region
          %s271 = sand.u32 %s51, 1
          %s272 = sand.u32 %s51, 1
          %s273 = smul.addr %s272, 16
          %s274 = scalar_lea.vmem [#allocation4], %s273
          %s275 = smul.addr %s15, 2
          %s276 = smul.addr %s275, 4
          %s277 = scalar_lea.vmem %s1, %s276
          // Predicated region
          $region41: #{anime_gan_generator_temporal_forward.1} parent=39 // pred_check
            _
          $region42: #{anime_gan_generator_temporal_forward.1} parent=39 // pred_check_branch
            %279 = sbr.rel (0) target = $region44
          $region43: #{anime_gan_generator_temporal_forward.1} parent=39 // pred_region
            // Predicated region
            $region45: #{anime_gan_generator_temporal_forward.1} parent=43 // pred_check
              _
            $region46: #{anime_gan_generator_temporal_forward.1} parent=43 // pred_check_branch
              %281 = sbr.rel (0) target = $region48
            $region47: #{anime_gan_generator_temporal_forward.1} parent=43 // pred_region
              // Predicated region
              $region60: #{anime_gan_generator_temporal_forward.1} parent=47 // pred_check
                _
              $region61: #{anime_gan_generator_temporal_forward.1} parent=47 // pred_check_branch
                %298 = sbr.rel (0) target = $region63
              $region62: #{anime_gan_generator_temporal_forward.1} parent=47 // pred_region
                loop: start=0, step=1, limit=1
                $region64: #{anime_gan_generator_temporal_forward.1} parent=62 // loop_pre_header
                  _
                $region65: #{anime_gan_generator_temporal_forward.1} parent=62 // loop_header
                  %s300 = sphi 0, %s304
                  %p301 = scmp.ge.s32.totalorder %s300, 1
                  %s305 = sphi %s277, %s277
                  %s306 = sphi %s274, %s274
                $region66: #{anime_gan_generator_temporal_forward.1} parent=62 // loop_header_branch
                  %303 = sbr.rel (%p301) target = $region70
                $region67: #{anime_gan_generator_temporal_forward.1} parent=62 // loop_body
                  %v307 = vld [vmem:[%s305] sm:$0xff]
                  %308 = vst [vmem:[%s306] sm:$0xff] %v307
                  %v309 = vld [vmem:[%s305 + $0x10] sm:$0xff]
                  %310 = vst [vmem:[%s306 + $0x8] sm:$0xff] %v309
                $region68: #{anime_gan_generator_temporal_forward.1} parent=62 // loop_footer
                  %s304 = sadd.s32 1, %s300
                $region69: #{anime_gan_generator_temporal_forward.1} parent=62 // loop_footer_branch
                  %299 = sbr.rel target = $region65
                $region70: #{anime_gan_generator_temporal_forward.1} parent=62 // loop_exit
                  _
              $region63: #{anime_gan_generator_temporal_forward.1} parent=47 // pred_fallthru
                _
              // Predicated region
              $region71: #{anime_gan_generator_temporal_forward.1} parent=47 // pred_check
                _
              $region72: #{anime_gan_generator_temporal_forward.1} parent=47 // pred_check_branch
                %312 = sbr.rel target = $region74
              $region73: #{anime_gan_generator_temporal_forward.1} parent=47 // pred_region
                _
              $region74: #{anime_gan_generator_temporal_forward.1} parent=47 // pred_fallthru
                _
            $region48: #{anime_gan_generator_temporal_forward.1} parent=43 // pred_fallthru
              _
            // Predicated region
            $region49: #{anime_gan_generator_temporal_forward.1} parent=43 // pred_check
              _
            $region50: #{anime_gan_generator_temporal_forward.1} parent=43 // pred_check_branch
              %283 = sbr.rel target = $region52
            $region51: #{anime_gan_generator_temporal_forward.1} parent=43 // pred_region
              loop: start=0, step=1, limit=1
              $region53: #{anime_gan_generator_temporal_forward.1} parent=51 // loop_pre_header
                _
              $region54: #{anime_gan_generator_temporal_forward.1} parent=51 // loop_header
                %s286 = sphi 0, %s290
                %p287 = scmp.ge.s32.totalorder %s286, 1
                %s291 = sphi %s277, %s277
                %s292 = sphi %s274, %s274
              $region55: #{anime_gan_generator_temporal_forward.1} parent=51 // loop_header_branch
                %289 = sbr.rel (%p287) target = $region59
              $region56: #{anime_gan_generator_temporal_forward.1} parent=51 // loop_body
                %v293 = vld [vmem:[%s291] sm:$0xff]
                %294 = vst [vmem:[%s292] sm:$0xff] %v293
                %v295 = vld [vmem:[%s291 + $0x10] sm:$0xff]
                %296 = vst [vmem:[%s292 + $0x8] sm:$0xff] %v295
              $region57: #{anime_gan_generator_temporal_forward.1} parent=51 // loop_footer
                %s290 = sadd.s32 1, %s286
              $region58: #{anime_gan_generator_temporal_forward.1} parent=51 // loop_footer_branch
                %285 = sbr.rel target = $region54
              $region59: #{anime_gan_generator_temporal_forward.1} parent=51 // loop_exit
                _
            $region52: #{anime_gan_generator_temporal_forward.1} parent=43 // pred_fallthru
              _
          $region44: #{anime_gan_generator_temporal_forward.1} parent=39 // pred_fallthru
            _
          %313 = vnop
        $region40: #{anime_gan_generator_temporal_forward.1} parent=31 // pred_fallthru
          _
        // Predicated region
        $region75: #{anime_gan_generator_temporal_forward.1} parent=31 // pred_check
          %p314 = pneg %p87
        $region76: #{anime_gan_generator_temporal_forward.1} parent=31 // pred_check_branch
          %316 = sbr.rel (%p314) target = $region78
        $region77: #{anime_gan_generator_temporal_forward.1} parent=31 // pred_region
          %s317 = sand.u32 %s77, 1
          %s318 = sand.u32 %s77, 1
          %s319 = smul.addr %s318, 16
          %s320 = scalar_lea.vmem [#allocation5], %s319
          %s321 = smul.addr %s15, 2
          %s322 = smul.addr %s321, 4
          %s323 = scalar_lea.vmem %s2, %s322
          // Predicated region
          $region79: #{anime_gan_generator_temporal_forward.1} parent=77 // pred_check
            _
          $region80: #{anime_gan_generator_temporal_forward.1} parent=77 // pred_check_branch
            %325 = sbr.rel (0) target = $region82
          $region81: #{anime_gan_generator_temporal_forward.1} parent=77 // pred_region
            // Predicated region
            $region83: #{anime_gan_generator_temporal_forward.1} parent=81 // pred_check
              _
            $region84: #{anime_gan_generator_temporal_forward.1} parent=81 // pred_check_branch
              %327 = sbr.rel (0) target = $region86
            $region85: #{anime_gan_generator_temporal_forward.1} parent=81 // pred_region
              // Predicated region
              $region98: #{anime_gan_generator_temporal_forward.1} parent=85 // pred_check
                _
              $region99: #{anime_gan_generator_temporal_forward.1} parent=85 // pred_check_branch
                %344 = sbr.rel (0) target = $region101
              $region100: #{anime_gan_generator_temporal_forward.1} parent=85 // pred_region
                loop: start=0, step=1, limit=1
                $region102: #{anime_gan_generator_temporal_forward.1} parent=100 // loop_pre_header
                  _
                $region103: #{anime_gan_generator_temporal_forward.1} parent=100 // loop_header
                  %s346 = sphi 0, %s350
                  %p347 = scmp.ge.s32.totalorder %s346, 1
                  %s351 = sphi %s323, %s323
                  %s352 = sphi %s320, %s320
                $region104: #{anime_gan_generator_temporal_forward.1} parent=100 // loop_header_branch
                  %349 = sbr.rel (%p347) target = $region108
                $region105: #{anime_gan_generator_temporal_forward.1} parent=100 // loop_body
                  %v353 = vld [vmem:[%s351] sm:$0xff]
                  %354 = vst [vmem:[%s352] sm:$0xff] %v353
                  %v355 = vld [vmem:[%s351 + $0x10] sm:$0xff]
                  %356 = vst [vmem:[%s352 + $0x8] sm:$0xff] %v355
                $region106: #{anime_gan_generator_temporal_forward.1} parent=100 // loop_footer
                  %s350 = sadd.s32 1, %s346
                $region107: #{anime_gan_generator_temporal_forward.1} parent=100 // loop_footer_branch
                  %345 = sbr.rel target = $region103
                $region108: #{anime_gan_generator_temporal_forward.1} parent=100 // loop_exit
                  _
              $region101: #{anime_gan_generator_temporal_forward.1} parent=85 // pred_fallthru
                _
              // Predicated region
              $region109: #{anime_gan_generator_temporal_forward.1} parent=85 // pred_check
                _
              $region110: #{anime_gan_generator_temporal_forward.1} parent=85 // pred_check_branch
                %358 = sbr.rel target = $region112
              $region111: #{anime_gan_generator_temporal_forward.1} parent=85 // pred_region
                _
              $region112: #{anime_gan_generator_temporal_forward.1} parent=85 // pred_fallthru
                _
            $region86: #{anime_gan_generator_temporal_forward.1} parent=81 // pred_fallthru
              _
            // Predicated region
            $region87: #{anime_gan_generator_temporal_forward.1} parent=81 // pred_check
              _
            $region88: #{anime_gan_generator_temporal_forward.1} parent=81 // pred_check_branch
              %329 = sbr.rel target = $region90
            $region89: #{anime_gan_generator_temporal_forward.1} parent=81 // pred_region
              loop: start=0, step=1, limit=1
              $region91: #{anime_gan_generator_temporal_forward.1} parent=89 // loop_pre_header
                _
              $region92: #{anime_gan_generator_temporal_forward.1} parent=89 // loop_header
                %s332 = sphi 0, %s336
                %p333 = scmp.ge.s32.totalorder %s332, 1
                %s337 = sphi %s323, %s323
                %s338 = sphi %s320, %s320
              $region93: #{anime_gan_generator_temporal_forward.1} parent=89 // loop_header_branch
                %335 = sbr.rel (%p333) target = $region97
              $region94: #{anime_gan_generator_temporal_forward.1} parent=89 // loop_body
                %v339 = vld [vmem:[%s337] sm:$0xff]
                %340 = vst [vmem:[%s338] sm:$0xff] %v339
                %v341 = vld [vmem:[%s337 + $0x10] sm:$0xff]
                %342 = vst [vmem:[%s338 + $0x8] sm:$0xff] %v341
              $region95: #{anime_gan_generator_temporal_forward.1} parent=89 // loop_footer
                %s336 = sadd.s32 1, %s332
              $region96: #{anime_gan_generator_temporal_forward.1} parent=89 // loop_footer_branch
                %331 = sbr.rel target = $region92
              $region97: #{anime_gan_generator_temporal_forward.1} parent=89 // loop_exit
                _
            $region90: #{anime_gan_generator_temporal_forward.1} parent=81 // pred_fallthru
              _
          $region82: #{anime_gan_generator_temporal_forward.1} parent=77 // pred_fallthru
            _
          %359 = vnop
        $region78: #{anime_gan_generator_temporal_forward.1} parent=31 // pred_fallthru
          _
      $region32: #{anime_gan_generator_temporal_forward.1} parent=5 // pred_fallthru
        _
      %p360 = scmp.le.s32.totalorder 1, %s15
      %p361 = scmp.lt.s32.totalorder %s15, 3
      %p362 = pnand %p360, %p361
      %p363 = pneg %p362
      // Predicated region
      $region113: #{anime_gan_generator_temporal_forward.1} parent=5 // pred_check
        _
      $region114: #{anime_gan_generator_temporal_forward.1} parent=5 // pred_check_branch
        %365 = sbr.rel (%p362) target = $region116
      $region115: #{anime_gan_generator_temporal_forward.1} parent=5 // pred_region
        %s366 = ssub.s32 %s15, 1
        %s367 = sand.u32 %s54, 1
        %s368 = sand.u32 %s54, 1
        %s369 = smul.addr %s368, 16
        %s370 = scalar_lea.vmem [#allocation4], %s369
        // Predicated region
        $region117: #{anime_gan_generator_temporal_forward.1} parent=115 // pred_check
          %p371 = pneg %p67
        $region118: #{anime_gan_generator_temporal_forward.1} parent=115 // pred_check_branch
          %373 = sbr.rel (%p371) target = $region120
        $region119: #{anime_gan_generator_temporal_forward.1} parent=115 // pred_region
          _
        $region120: #{anime_gan_generator_temporal_forward.1} parent=115 // pred_fallthru
          _
        %s374 = sand.u32 %s80, 1
        %s375 = sand.u32 %s80, 1
        %s376 = smul.addr %s375, 16
        %s377 = scalar_lea.vmem [#allocation5], %s376
        // Predicated region
        $region121: #{anime_gan_generator_temporal_forward.1} parent=115 // pred_check
          %p378 = pneg %p93
        $region122: #{anime_gan_generator_temporal_forward.1} parent=115 // pred_check_branch
          %380 = sbr.rel (%p378) target = $region124
        $region123: #{anime_gan_generator_temporal_forward.1} parent=115 // pred_region
          _
        $region124: #{anime_gan_generator_temporal_forward.1} parent=115 // pred_fallthru
          _
        %p381 = scmp.lt.s32.totalorder %s20, 1
        %s382 = scalar_select %p381, %s20, 1
        %s383 = smul.addr %s382, 2
        %s384 = smul.addr %s383, 4
        %s385 = scalar_lea.vmem %s0, %s384
        %p386 = pneg %p41
        %p387 = pneg %p38
        %s388 = sand.u32 %s54, 1
        %s389 = sand.u32 %s54, 1
        %s390 = smul.addr %s389, 16
        %s391 = scalar_lea.vmem [#allocation4], %s390
        %p392 = pneg %p67
        %p393 = pneg %p64
        %s394 = sand.u32 %s80, 1
        %s395 = sand.u32 %s80, 1
        %s396 = smul.addr %s395, 16
        %s397 = scalar_lea.vmem [#allocation5], %s396
        %p398 = pneg %p93
        %p399 = pneg %p90
        %p400 = pneg %p114
        %p401 = pneg %p111
        %p402 = pneg %p135
        %p403 = pneg %p132
        %p404 = pneg %p156
        %p405 = pneg %p153
        %p406 = pneg %p177
        %p407 = pneg %p174
        %p408 = pneg %p203
        %p409 = pneg %p200
        %p410 = scmp.lt.s32.totalorder %s20, 1
        %s411 = scalar_select %p410, %s20, 1
        %s412 = smul.addr %s411, 2
        %s413 = smul.addr %s412, 4
        %s414 = scalar_lea.vmem %s7, %s413
        %p415 = pneg %p229
        %p416 = pneg %p226
        %s417 = sand.u32 %s216, 1
        %s418 = sand.u32 %s216, 1
        %s419 = smul.addr %s418, 16
        %s420 = scalar_lea.vmem [#allocation6], %s419
        %p421 = scmp.lt.s32.totalorder %s20, 1
        %s422 = scalar_select %p421, %s20, 1
        %s423 = smul.addr %s422, 2
        %s424 = smul.addr %s423, 4
        %s425 = scalar_lea.vmem %s0, %s424
        %p426 = scmp.lt.s32.totalorder %s20, 1
        %s427 = scalar_select %p426, %s20, 1
        %s428 = smul.addr %s427, 2
        %s429 = smul.addr %s428, 4
        %s430 = scalar_lea.vmem %s7, %s429
        %431 = vst [vmem:[#allocation2] sm:$0xff] 0.0
        %432 = vst [vmem:[#allocation2 + $0x8] sm:$0xff] 0.0
        %433 = vst [vmem:[#allocation2 + $0x10] sm:$0xff] 0.0
        %434 = vst [vmem:[#allocation2 + $0x18] sm:$0xff] 0.0
        %435 = vst [vmem:[#allocation3] sm:$0xff] 0.0
        %436 = vst [vmem:[#allocation3 + $0x8] sm:$0xff] 0.0
        %437 = vst [vmem:[#allocation3 + $0x10] sm:$0xff] 0.0
        %438 = vst [vmem:[#allocation3 + $0x18] sm:$0xff] 0.0
        %439 = vst [vmem:[#allocation3 + $0x20] sm:$0xff] 0.0
        %440 = vst [vmem:[#allocation3 + $0x28] sm:$0xff] 0.0
        %441 = vst [vmem:[#allocation3 + $0x30] sm:$0xff] 0.0
        %442 = vst [vmem:[#allocation3 + $0x38] sm:$0xff] 0.0
        %443 = vst [vmem:[#allocation3 + $0x40] sm:$0xff] 0.0
        %444 = vst [vmem:[#allocation3 + $0x48] sm:$0xff] 0.0
        %445 = vst [vmem:[#allocation3 + $0x50] sm:$0xff] 0.0
        %446 = vst [vmem:[#allocation3 + $0x58] sm:$0xff] 0.0
        %447 = vst [vmem:[#allocation3 + $0x60] sm:$0xff] 0.0
        %448 = vst [vmem:[#allocation3 + $0x68] sm:$0xff] 0.0
        %449 = vst [vmem:[#allocation3 + $0x70] sm:$0xff] 0.0
        %450 = vst [vmem:[#allocation3 + $0x78] sm:$0xff] 0.0
        %451 = vst [vmem:[#allocation3 + $0x80] sm:$0xff] 0.0
        %452 = vst [vmem:[#allocation3 + $0x88] sm:$0xff] 0.0
        %v453 = vlaneseq
        %v454 = vand.u32 %v453, 127
        %v455 = vadd.s32 %v454, 128
        %vm456 = vcmp.lt.s32.totalorder %v454, 0
        %v457 = vsub.s32 0, %v454
        %v458 = vsel %vm456, %v457, %v454
        %v459 = vshrl.u32 %v458, 4
        %v460 = vand.u32 %v458, 15
        %v461 = vsub.s32 0, %v460
        %v462 = vsel %vm456, %v461, %v460
        %vm463 = vcmp.lt.s32.totalorder %v455, 0
        %v464 = vsub.s32 0, %v455
        %v465 = vsel %vm463, %v464, %v455
        %v466 = vshrl.u32 %v465, 4
        %v467 = vand.u32 %v465, 15
        %v468 = vsub.s32 0, %v467
        %v469 = vsel %vm463, %v468, %v467
        %vm470 = vcmp.ne.s32.totalorder %v462, 0
        %vm471 = vcmp.ne.s32.totalorder %v469, 0
        %vm472 = vcmp.lt.s32.totalorder %v462, 0
        %vm473 = vcmp.lt.s32.totalorder %v469, 0
        %vm474 = vmand %vm472, %vm470
        %vm475 = vmand %vm473, %vm471
        %v476 = vadd.s32 %v462, 16
        %v477 = vadd.s32 %v469, 16
        %v478 = vsel %vm474, %v476, %v462
        %v479 = vsel %vm475, %v477, %v469
        %vm480 = vcmp.ne.s32.totalorder %v478, 0
        %vm481 = vcmp.ne.s32.totalorder %v479, 0
        %v482 = vsel %vm480, 1, 0
        %v483 = vsel %vm481, 1, 0
        %v484 = vcvt.s32.f32 %v482
        %v485 = vcvt.s32.f32 %v483
        %vm486 = vcmp.ne.s32.totalorder %v478, 15
        %vm487 = vcmp.ne.s32.totalorder %v479, 15
        %v488 = vsel %vm486, 1, 0
        %v489 = vsel %vm487, 1, 0
        %v490 = vcvt.s32.f32 %v488
        %v491 = vcvt.s32.f32 %v489
        %v492 = vld [vmem:[%s425] sm:$0x77]
        %v493 = vld [vmem:[%s377] sm:$0x77]
        %v495 = vcombine.high %v492, %v492
        %497 = vst [vmem:[#allocation2 + $0x8] sm:$0x7] %v492
        %498 = vst [vmem:[#allocation2 + $0x10] sm:$0x7] %v495
        %v499 = vld [vmem:[%s370] sm:$0x77]
        %v501 = vcombine.high %v499, %v499
        %v502 = vrot.slane %v499, 5
        %v503 = vrot.slane %v501, 5
        %506 = vst [vmem:[#allocation2 + $0x8] sm:$0x38] %v502
        %507 = vst [vmem:[#allocation2 + $0x10] sm:$0x38] %v503
        %v508 = vld [vmem:[%s3] sm:$0xff]
        %v509 = vld [vmem:[%s3 + $0x8] sm:$0xf]
        %v510 = vld [vmem:[%s4] sm:$0xff]
        %v511 = vld [vmem:[%s4 + $0x8] sm:$0xf]
        %v512 = vld [vmem:[#allocation2] sm:$0x3f]
        %v513 = vld [vmem:[#allocation2 + $0x8] sm:$0x3f]
        %v514 = vld [vmem:[#allocation2 + $0x10] sm:$0x3f]
        %517 = vrot.lane.b32.xlu0 %v484, 111
        %v518 = vpop.permute.xlu0 %517
        %519 = vrot.lane.b32.xlu0 %v485, 111
        %v520 = vpop.permute.xlu0 %519
        %vm521 = vcmask 908288
        %v522 = vsel %vm521, %v518, %v520
        %v526 = vmul.f32 %v512, %v518
        %v527 = vmul.f32 %v513, %v522
        %v528 = vmul.f32 %v514, %v520
        %532 = vrot.lane.b32.xlu0 %v526, 17
        %v533 = vpop.permute.xlu0 %532
        %534 = vrot.lane.b32.xlu0 %v527, 17
        %v535 = vpop.permute.xlu0 %534
        %536 = vrot.lane.b32.xlu0 %v528, 17
        %v537 = vpop.permute.xlu0 %536
        %vm538 = vcmask 138240
        %v539 = vsel %vm538, %v533, %v535
        %v540 = vsel %vm538, %v535, %v537
        %543 = vst [vmem:[#allocation3] sm:$0x3f] %v539
        %544 = vst [vmem:[#allocation3 + $0x8] sm:$0x3f] %v540
        %v545 = vld [vmem:[#allocation2] sm:$0x3f]
        %v546 = vld [vmem:[#allocation2 + $0x8] sm:$0x3f]
        %v547 = vld [vmem:[#allocation2 + $0x10] sm:$0x3f]
        %551 = vrot.lane.b32.xlu0 %v545, 16
        %v552 = vpop.permute.xlu0 %551
        %553 = vrot.lane.b32.xlu0 %v546, 16
        %v554 = vpop.permute.xlu0 %553
        %555 = vrot.lane.b32.xlu0 %v547, 16
        %v556 = vpop.permute.xlu0 %555
        %vm557 = vcmask 130048
        %v558 = vsel %vm557, %v552, %v554
        %v559 = vsel %vm557, %v554, %v556
        %562 = vst [vmem:[#allocation3 + $0x10] sm:$0x3f] %v558
        %563 = vst [vmem:[#allocation3 + $0x18] sm:$0x3f] %v559
        %v564 = vld [vmem:[#allocation2] sm:$0x3f]
        %v565 = vld [vmem:[#allocation2 + $0x8] sm:$0x3f]
        %v566 = vld [vmem:[#allocation2 + $0x10] sm:$0x3f]
        %569 = vrot.lane.b32.xlu0 %v490, 113
        %v570 = vpop.permute.xlu0 %569
        %571 = vrot.lane.b32.xlu0 %v491, 113
        %v572 = vpop.permute.xlu0 %571
        %vm573 = vcmask 924672
        %v574 = vsel %vm573, %v570, %v572
        %v578 = vmul.f32 %v564, %v570
        %v579 = vmul.f32 %v565, %v574
        %v580 = vmul.f32 %v566, %v572
        %584 = vrot.lane.b32.xlu0 %v578, 15
        %v585 = vpop.permute.xlu0 %584
        %586 = vrot.lane.b32.xlu0 %v579, 15
        %v587 = vpop.permute.xlu0 %586
        %588 = vrot.lane.b32.xlu0 %v580, 15
        %v589 = vpop.permute.xlu0 %588
        %vm590 = vcmask 121856
        %v591 = vsel %vm590, %v585, %v587
        %v592 = vsel %vm590, %v587, %v589
        %595 = vst [vmem:[#allocation3 + $0x20] sm:$0x3f] %v591
        %596 = vst [vmem:[#allocation3 + $0x28] sm:$0x3f] %v592
        %v597 = vld [vmem:[#allocation2] sm:$0x3f]
        %v598 = vld [vmem:[#allocation2 + $0x8] sm:$0x3f]
        %v599 = vld [vmem:[#allocation2 + $0x10] sm:$0x3f]
        %600 = vrot.lane.b32.xlu0 %v484, 127
        %v601 = vpop.permute.xlu0 %600
        %602 = vrot.lane.b32.xlu0 %v485, 127
        %v603 = vpop.permute.xlu0 %602
        %vm604 = vcmask 1039360
        %v605 = vsel %vm604, %v601, %v603
        %v609 = vmul.f32 %v597, %v601
        %v610 = vmul.f32 %v598, %v605
        %v611 = vmul.f32 %v599, %v603
        %615 = vrot.lane.b32.xlu0 %v609, 1
        %v616 = vpop.permute.xlu0 %615
        %617 = vrot.lane.b32.xlu0 %v610, 1
        %v618 = vpop.permute.xlu0 %617
        %619 = vrot.lane.b32.xlu0 %v611, 1
        %v620 = vpop.permute.xlu0 %619
        %vm621 = vcmask 7168
        %v622 = vsel %vm621, %v616, %v618
        %v623 = vsel %vm621, %v618, %v620
        %626 = vst [vmem:[#allocation3 + $0x30] sm:$0x3f] %v622
        %627 = vst [vmem:[#allocation3 + $0x38] sm:$0x3f] %v623
        %v628 = vld [vmem:[#allocation2 + $0x8] sm:$0x3f]
        %v629 = vld [vmem:[#allocation2 + $0x10] sm:$0x3f]
        %630 = vst [vmem:[#allocation3 + $0x40] sm:$0x3f] %v628
        %631 = vst [vmem:[#allocation3 + $0x48] sm:$0x3f] %v629
        %v632 = vld [vmem:[#allocation2 + $0x8] sm:$0x3f]
        %v633 = vld [vmem:[#allocation2 + $0x10] sm:$0x3f]
        %v634 = vld [vmem:[#allocation2 + $0x18] sm:$0x3f]
        %635 = vrot.lane.b32.xlu0 %v490, 1
        %v636 = vpop.permute.xlu0 %635
        %637 = vrot.lane.b32.xlu0 %v491, 1
        %v638 = vpop.permute.xlu0 %637
        %v639 = vsel %vm621, %v636, %v638
        %v643 = vmul.f32 %v632, %v636
        %v644 = vmul.f32 %v633, %v639
        %v645 = vmul.f32 %v634, %v638
        %649 = vrot.lane.b32.xlu0 %v643, 127
        %v650 = vpop.permute.xlu0 %649
        %651 = vrot.lane.b32.xlu0 %v644, 127
        %v652 = vpop.permute.xlu0 %651
        %653 = vrot.lane.b32.xlu0 %v645, 127
        %v654 = vpop.permute.xlu0 %653
        %v655 = vsel %vm604, %v650, %v652
        %v656 = vsel %vm604, %v652, %v654
        %659 = vst [vmem:[#allocation3 + $0x50] sm:$0x3f] %v655
        %660 = vst [vmem:[#allocation3 + $0x58] sm:$0x3f] %v656
        %v661 = vld [vmem:[#allocation2 + $0x8] sm:$0x3f]
        %v662 = vld [vmem:[#allocation2 + $0x10] sm:$0x3f]
        %v663 = vld [vmem:[#allocation2 + $0x18] sm:$0x3f]
        %664 = vrot.lane.b32.xlu0 %v484, 15
        %v665 = vpop.permute.xlu0 %664
        %666 = vrot.lane.b32.xlu0 %v485, 15
        %v667 = vpop.permute.xlu0 %666
        %v668 = vsel %vm590, %v665, %v667
        %v672 = vmul.f32 %v661, %v665
        %v673 = vmul.f32 %v662, %v668
        %v674 = vmul.f32 %v663, %v667
        %678 = vrot.lane.b32.xlu0 %v672, 113
        %v679 = vpop.permute.xlu0 %678
        %680 = vrot.lane.b32.xlu0 %v673, 113
        %v681 = vpop.permute.xlu0 %680
        %682 = vrot.lane.b32.xlu0 %v674, 113
        %v683 = vpop.permute.xlu0 %682
        %v684 = vsel %vm573, %v679, %v681
        %v685 = vsel %vm573, %v681, %v683
        %688 = vst [vmem:[#allocation3 + $0x60] sm:$0x3f] %v684
        %689 = vst [vmem:[#allocation3 + $0x68] sm:$0x3f] %v685
        %v690 = vld [vmem:[#allocation2 + $0x8] sm:$0x3f]
        %v691 = vld [vmem:[#allocation2 + $0x10] sm:$0x3f]
        %v692 = vld [vmem:[#allocation2 + $0x18] sm:$0x3f]
        %696 = vrot.lane.b32.xlu0 %v690, 112
        %v697 = vpop.permute.xlu0 %696
        %698 = vrot.lane.b32.xlu0 %v691, 112
        %v699 = vpop.permute.xlu0 %698
        %700 = vrot.lane.b32.xlu0 %v692, 112
        %v701 = vpop.permute.xlu0 %700
        %vm702 = vcmask 916480
        %v703 = vsel %vm702, %v697, %v699
        %v704 = vsel %vm702, %v699, %v701
        %707 = vst [vmem:[#allocation3 + $0x70] sm:$0x3f] %v703
        %708 = vst [vmem:[#allocation3 + $0x78] sm:$0x3f] %v704
        %v709 = vld [vmem:[#allocation2 + $0x8] sm:$0x3f]
        %v710 = vld [vmem:[#allocation2 + $0x10] sm:$0x3f]
        %v711 = vld [vmem:[#allocation2 + $0x18] sm:$0x3f]
        %712 = vrot.lane.b32.xlu0 %v490, 17
        %v713 = vpop.permute.xlu0 %712
        %714 = vrot.lane.b32.xlu0 %v491, 17
        %v715 = vpop.permute.xlu0 %714
        %v716 = vsel %vm538, %v713, %v715
        %v720 = vmul.f32 %v709, %v713
        %v721 = vmul.f32 %v710, %v716
        %v722 = vmul.f32 %v711, %v715
        %726 = vrot.lane.b32.xlu0 %v720, 111
        %v727 = vpop.permute.xlu0 %726
        %728 = vrot.lane.b32.xlu0 %v721, 111
        %v729 = vpop.permute.xlu0 %728
        %730 = vrot.lane.b32.xlu0 %v722, 111
        %v731 = vpop.permute.xlu0 %730
        %v732 = vsel %vm521, %v727, %v729
        %v733 = vsel %vm521, %v729, %v731
        %736 = vst [vmem:[#allocation3 + $0x80] sm:$0x3f] %v732
        %737 = vst [vmem:[#allocation3 + $0x88] sm:$0x3f] %v733
        %v738 = vld [vmem:[#allocation3] sm:$0xff]
        %v739 = vld [vmem:[#allocation3 + $0x8] sm:$0xff]
        %v740 = vld [vmem:[#allocation3 + $0x10] sm:$0xff]
        %v741 = vld [vmem:[#allocation3 + $0x18] sm:$0xff]
        %v742 = vld [vmem:[#allocation3 + $0x20] sm:$0xff]
        %v743 = vld [vmem:[#allocation3 + $0x28] sm:$0xff]
        %v744 = vld [vmem:[#allocation3 + $0x30] sm:$0xff]
        %v745 = vld [vmem:[#allocation3 + $0x38] sm:$0xff]
        %v746 = vld [vmem:[#allocation3 + $0x40] sm:$0xff]
        %v747 = vld [vmem:[#allocation3 + $0x48] sm:$0xff]
        %v748 = vld [vmem:[#allocation3 + $0x50] sm:$0xff]
        %v749 = vld [vmem:[#allocation3 + $0x58] sm:$0xff]
        %v750 = vld [vmem:[#allocation3 + $0x60] sm:$0xff]
        %v751 = vld [vmem:[#allocation3 + $0x68] sm:$0xff]
        %v752 = vld [vmem:[#allocation3 + $0x70] sm:$0xff]
        %v753 = vld [vmem:[#allocation3 + $0x78] sm:$0xff]
        %v754 = vld [vmem:[#allocation3 + $0x80] sm:$0xff]
        %v755 = vld [vmem:[#allocation3 + $0x88] sm:$0xff]
        %757 = vset.pattern.permute.xlu0 0
        %758 = vperm.xlu0 %757, %v510
        %v759 = vpop.permute.xlu0 %758
        %762 = vset.pattern.permute.xlu0 0
        %763 = vperm.xlu0 %762, %v511
        %v764 = vpop.permute.xlu0 %763
        %vm766 = vcmask 588800
        %v768 = vsel %vm766, %v508, 0
        %v771 = vsel %vm766, %v509, 0
        %773 = vmatprep.subr.mxu0 %v739
        %774 = vmatpush1.msra.mxu0 %v738
        %775 = vmatprep.subr.mxu0 %v741
        %776 = vmatpush1.msra.mxu0 %v740
        %777 = vmatprep.subr.mxu0 %v743
        %778 = vmatpush1.msra.mxu0 %v742
        %779 = vmatprep.subr.mxu0 %v745
        %780 = vmatpush1.msra.mxu0 %v744
        %781 = vmatprep.subr.mxu0 %v747
        %782 = vmatpush1.msra.mxu0 %v746
        %783 = vmatprep.subr.mxu0 %v749
        %784 = vmatpush1.msra.mxu0 %v748
        %785 = vmatprep.subr.mxu0 %v751
        %786 = vmatpush1.msra.mxu0 %v750
        %787 = vmatprep.subr.mxu0 %v753
        %788 = vmatpush1.msra.mxu0 %v752
        %789 = vmatprep.subr.mxu0 %v755
        %790 = vmatpush1.msra.mxu0 %v754
        %791 = vmatprep.subr.mxu0 0.0
        %792 = vmatpush1.msra.mxu0 0.0
        %793 = vmatprep.subr.mxu0 0.0
        %794 = vmatpush1.msra.mxu0 0.0
        %795 = vmatprep.subr.mxu0 0.0
        %796 = vmatpush1.msra.mxu0 0.0
        %797 = vmatprep.subr.mxu0 0.0
        %798 = vmatpush1.msra.mxu0 0.0
        %799 = vmatprep.subr.mxu0 0.0
        %800 = vmatpush1.msra.mxu0 0.0
        %801 = vmatprep.subr.mxu0 0.0
        %802 = vmatpush1.msra.mxu0 0.0
        %803 = vmatprep.subr.mxu0 0.0
        %804 = vmatpush1.msra.mxu0 0.0
        %805 = vmatprep.subr.mxu0 0.0
        %806 = vmatpush1.msra.mxu0 0.0
        %807 = vmatprep.subr.mxu0 0.0
        %808 = vmatpush1.msra.mxu0 0.0
        %809 = vmatprep.subr.mxu0 0.0
        %810 = vmatpush1.msra.mxu0 0.0
        %811 = vmatprep.subr.mxu0 0.0
        %812 = vmatpush1.msra.mxu0 0.0
        %813 = vmatprep.subr.mxu0 0.0
        %814 = vmatpush1.msra.mxu0 0.0
        %815 = vmatprep.subr.mxu0 0.0
        %816 = vmatpush1.msra.mxu0 0.0
        %817 = vmatprep.subr.mxu0 0.0
        %818 = vmatpush1.msra.mxu0 0.0
        %819 = vmatprep.subr.mxu0 0.0
        %820 = vmatpush1.msra.mxu0 0.0
        %821 = vmatprep.subr.mxu0 0.0
        %822 = vmatpush1.msra.mxu0 0.0
        %823 = vmatprep.subr.mxu0 0.0
        %824 = vmatpush1.msra.mxu0 0.0
        %825 = vmatprep.subr.mxu0 0.0
        %826 = vmatpush1.msra.mxu0 0.0
        %827 = vmatprep.subr.mxu0 0.0
        %828 = vmatpush1.msra.mxu0 0.0
        %829 = vmatprep.subr.mxu0 0.0
        %830 = vmatpush1.msra.mxu0 0.0
        %831 = vmatprep.subr.mxu0 0.0
        %832 = vmatpush1.msra.mxu0 0.0
        %833 = vmatprep.subr.mxu0 0.0
        %834 = vmatpush1.msra.mxu0 0.0
        %835 = vmatprep.subr.mxu0 0.0
        %836 = vmatpush1.msra.mxu0 0.0
        %837 = vmatprep.mubr.f32.mxu0 0.0
        %838 = vmatmul.mubr.f32.gmra.mrb[0].mxu0 %v768
        %v839 = vpop.f32.mrb[0].mxu0
        %v840 = vadd.f32 %v759, %v839
        %v841 = vpop.f32.mrb[0].mxu0
        %v842 = vadd.f32 %v759, %v841
        %843 = vmatprep.mubr.f32.mxu0 0.0
        %844 = vmatmul.mubr.f32.gmra.mrb[0].mxu0 %v771
        %v845 = vpop.f32.mrb[0].mxu0
        %v846 = vadd.f32 %v764, %v845
        %v847 = vpop.f32.mrb[0].mxu0
        %v848 = vadd.f32 %v764, %v847
        %849 = vdwg.mxu0
        %v850 = vmul.f32 %v840, 0.5
        %v851 = vmul.f32 %v842, 0.5
        %v852 = vtanh.pop %v850
        %v853 = vtanh.pop %v851
        %v854 = vmul.f32 %v852, 0.5
        %v855 = vmul.f32 %v853, 0.5
        %v856 = vadd.f32 %v854, 0.5
        %v857 = vadd.f32 %v855, 0.5
        %v858 = vmul.f32 %v846, 0.5
        %v859 = vmul.f32 %v848, 0.5
        %v860 = vtanh.pop %v858
        %v861 = vtanh.pop %v859
        %v862 = vmul.f32 %v860, 0.5
        %v863 = vmul.f32 %v861, 0.5
        %v864 = vadd.f32 %v862, 0.5
        %v865 = vadd.f32 %v863, 0.5
        %v866 = vtanh.pop %v846
        %v867 = vtanh.pop %v848
        %v869 = vcombine.high %v493, %v493
        %v870 = vrot.slane %v493, 5
        %v871 = vrot.slane %v869, 5
        %v874 = vmul.f32 %v856, %v870
        %v875 = vmul.f32 %v857, %v871
        %v878 = vrot.slane %v866, 1
        %v879 = vrot.slane %v867, 1
        %v882 = vmul.f32 %v856, %v878
        %v883 = vmul.f32 %v857, %v879
        %v886 = vrot.slane %v882, 5
        %v887 = vrot.slane %v883, 5
        %v890 = vadd.f32 %v874, %v886
        %v891 = vadd.f32 %v875, %v887
        %v892 = vtanh.pop %v890
        %v893 = vtanh.pop %v891
        %v896 = vrot.slane %v892, 5
        %v897 = vrot.slane %v893, 5
        %v900 = vmul.f32 %v856, %v896
        %v901 = vmul.f32 %v857, %v897
        %v902 = vmul.f32 %v864, %v896
        %v903 = vmul.f32 %v865, %v897
        %v906 = vcombine.low %v890, %v891
        %v907 = vcombine.high %v890, %v891
        %vm908 = vcmask 1040384
        %vm909 = vcmask 1044484
        %vm910 = vmor %vm908, %vm909
        %v911 = vrot.slane %v906, 7
        %v912 = vrot.slane %v911, 4
        %v913 = vrot.slane %v907, 7
        %v914 = vsel %vm910, %v912, %v913
        %916 = vst [vmem:[%s420] sm:$0x77] %v914
        %s917 = scalar_lea.vmem %s377, 8 [#allocation5]
        %v918 = vld [vmem:[%s917] sm:$0x77]
        %vm923 = vcmask 1041408
        %v924 = vrot.slane %v900, 6
        %v925 = vrot.slane %v902, 6
        %v926 = vsel %vm923, %v924, %v925
        %v927 = vrot.slane %v901, 6
        %v928 = vrot.slane %v903, 6
        %v929 = vsel %vm923, %v927, %v928
        %932 = vst [vmem:[#allocation2 + $0x8] sm:$0x7] %v926
        %933 = vst [vmem:[#allocation2 + $0x10] sm:$0x7] %v929
        %s934 = scalar_lea.vmem %s370, 8 [#allocation4]
        %v935 = vld [vmem:[%s934] sm:$0x77]
        %v937 = vcombine.high %v935, %v935
        %v938 = vrot.slane %v935, 5
        %v939 = vrot.slane %v937, 5
        %942 = vst [vmem:[#allocation2 + $0x8] sm:$0x38] %v938
        %943 = vst [vmem:[#allocation2 + $0x10] sm:$0x38] %v939
        %s944 = scalar_lea.vmem %s3, 16
        %v945 = vld [vmem:[%s944] sm:$0xff]
        %v946 = vld [vmem:[%s944 + $0x8] sm:$0xf]
        %s947 = scalar_lea.vmem %s4, 16
        %v948 = vld [vmem:[%s947] sm:$0xff]
        %v949 = vld [vmem:[%s947 + $0x8] sm:$0xf]
        %v950 = vld [vmem:[#allocation2] sm:$0x3f]
        %v951 = vld [vmem:[#allocation2 + $0x8] sm:$0x3f]
        %v952 = vld [vmem:[#allocation2 + $0x10] sm:$0x3f]
        %v953 = vmul.f32 %v950, %v518
        %v954 = vmul.f32 %v951, %v522
        %v955 = vmul.f32 %v952, %v520
        %959 = vrot.lane.b32.xlu0 %v953, 17
        %v960 = vpop.permute.xlu0 %959
        %961 = vrot.lane.b32.xlu0 %v954, 17
        %v962 = vpop.permute.xlu0 %961
        %963 = vrot.lane.b32.xlu0 %v955, 17
        %v964 = vpop.permute.xlu0 %963
        %v965 = vsel %vm538, %v960, %v962
        %v966 = vsel %vm538, %v962, %v964
        %969 = vst [vmem:[#allocation3] sm:$0x3f] %v965
        %970 = vst [vmem:[#allocation3 + $0x8] sm:$0x3f] %v966
        %v971 = vld [vmem:[#allocation2] sm:$0x3f]
        %v972 = vld [vmem:[#allocation2 + $0x8] sm:$0x3f]
        %v973 = vld [vmem:[#allocation2 + $0x10] sm:$0x3f]
        %977 = vrot.lane.b32.xlu0 %v971, 16
        %v978 = vpop.permute.xlu0 %977
        %979 = vrot.lane.b32.xlu0 %v972, 16
        %v980 = vpop.permute.xlu0 %979
        %981 = vrot.lane.b32.xlu0 %v973, 16
        %v982 = vpop.permute.xlu0 %981
        %v983 = vsel %vm557, %v978, %v980
        %v984 = vsel %vm557, %v980, %v982
        %987 = vst [vmem:[#allocation3 + $0x10] sm:$0x3f] %v983
        %988 = vst [vmem:[#allocation3 + $0x18] sm:$0x3f] %v984
        %v989 = vld [vmem:[#allocation2] sm:$0x3f]
        %v990 = vld [vmem:[#allocation2 + $0x8] sm:$0x3f]
        %v991 = vld [vmem:[#allocation2 + $0x10] sm:$0x3f]
        %v992 = vmul.f32 %v989, %v570
        %v993 = vmul.f32 %v990, %v574
        %v994 = vmul.f32 %v991, %v572
        %998 = vrot.lane.b32.xlu0 %v992, 15
        %v999 = vpop.permute.xlu0 %998
        %1000 = vrot.lane.b32.xlu0 %v993, 15
        %v1001 = vpop.permute.xlu0 %1000
        %1002 = vrot.lane.b32.xlu0 %v994, 15
        %v1003 = vpop.permute.xlu0 %1002
        %v1004 = vsel %vm590, %v999, %v1001
        %v1005 = vsel %vm590, %v1001, %v1003
        %1008 = vst [vmem:[#allocation3 + $0x20] sm:$0x3f] %v1004
        %1009 = vst [vmem:[#allocation3 + $0x28] sm:$0x3f] %v1005
        %v1010 = vld [vmem:[#allocation2] sm:$0x3f]
        %v1011 = vld [vmem:[#allocation2 + $0x8] sm:$0x3f]
        %v1012 = vld [vmem:[#allocation2 + $0x10] sm:$0x3f]
        %v1013 = vmul.f32 %v1010, %v601
        %v1014 = vmul.f32 %v1011, %v605
        %v1015 = vmul.f32 %v1012, %v603
        %1019 = vrot.lane.b32.xlu0 %v1013, 1
        %v1020 = vpop.permute.xlu0 %1019
        %1021 = vrot.lane.b32.xlu0 %v1014, 1
        %v1022 = vpop.permute.xlu0 %1021
        %1023 = vrot.lane.b32.xlu0 %v1015, 1
        %v1024 = vpop.permute.xlu0 %1023
        %v1025 = vsel %vm621, %v1020, %v1022
        %v1026 = vsel %vm621, %v1022, %v1024
        %1029 = vst [vmem:[#allocation3 + $0x30] sm:$0x3f] %v1025
        %1030 = vst [vmem:[#allocation3 + $0x38] sm:$0x3f] %v1026
        %v1031 = vld [vmem:[#allocation2 + $0x8] sm:$0x3f]
        %v1032 = vld [vmem:[#allocation2 + $0x10] sm:$0x3f]
        %1033 = vst [vmem:[#allocation3 + $0x40] sm:$0x3f] %v1031
        %1034 = vst [vmem:[#allocation3 + $0x48] sm:$0x3f] %v1032
        %v1035 = vld [vmem:[#allocation2 + $0x8] sm:$0x3f]
        %v1036 = vld [vmem:[#allocation2 + $0x10] sm:$0x3f]
        %v1037 = vld [vmem:[#allocation2 + $0x18] sm:$0x3f]
        %v1038 = vmul.f32 %v1035, %v636
        %v1039 = vmul.f32 %v1036, %v639
        %v1040 = vmul.f32 %v1037, %v638
        %1044 = vrot.lane.b32.xlu0 %v1038, 127
        %v1045 = vpop.permute.xlu0 %1044
        %1046 = vrot.lane.b32.xlu0 %v1039, 127
        %v1047 = vpop.permute.xlu0 %1046
        %1048 = vrot.lane.b32.xlu0 %v1040, 127
        %v1049 = vpop.permute.xlu0 %1048
        %v1050 = vsel %vm604, %v1045, %v1047
        %v1051 = vsel %vm604, %v1047, %v1049
        %1054 = vst [vmem:[#allocation3 + $0x50] sm:$0x3f] %v1050
        %1055 = vst [vmem:[#allocation3 + $0x58] sm:$0x3f] %v1051
        %v1056 = vld [vmem:[#allocation2 + $0x8] sm:$0x3f]
        %v1057 = vld [vmem:[#allocation2 + $0x10] sm:$0x3f]
        %v1058 = vld [vmem:[#allocation2 + $0x18] sm:$0x3f]
        %v1059 = vmul.f32 %v1056, %v665
        %v1060 = vmul.f32 %v1057, %v668
        %v1061 = vmul.f32 %v1058, %v667
        %1065 = vrot.lane.b32.xlu0 %v1059, 113
        %v1066 = vpop.permute.xlu0 %1065
        %1067 = vrot.lane.b32.xlu0 %v1060, 113
        %v1068 = vpop.permute.xlu0 %1067
        %1069 = vrot.lane.b32.xlu0 %v1061, 113
        %v1070 = vpop.permute.xlu0 %1069
        %v1071 = vsel %vm573, %v1066, %v1068
        %v1072 = vsel %vm573, %v1068, %v1070
        %1075 = vst [vmem:[#allocation3 + $0x60] sm:$0x3f] %v1071
        %1076 = vst [vmem:[#allocation3 + $0x68] sm:$0x3f] %v1072
        %v1077 = vld [vmem:[#allocation2 + $0x8] sm:$0x3f]
        %v1078 = vld [vmem:[#allocation2 + $0x10] sm:$0x3f]
        %v1079 = vld [vmem:[#allocation2 + $0x18] sm:$0x3f]
        %1083 = vrot.lane.b32.xlu0 %v1077, 112
        %v1084 = vpop.permute.xlu0 %1083
        %1085 = vrot.lane.b32.xlu0 %v1078, 112
        %v1086 = vpop.permute.xlu0 %1085
        %1087 = vrot.lane.b32.xlu0 %v1079, 112
        %v1088 = vpop.permute.xlu0 %1087
        %v1089 = vsel %vm702, %v1084, %v1086
        %v1090 = vsel %vm702, %v1086, %v1088
        %1093 = vst [vmem:[#allocation3 + $0x70] sm:$0x3f] %v1089
        %1094 = vst [vmem:[#allocation3 + $0x78] sm:$0x3f] %v1090
        %v1095 = vld [vmem:[#allocation2 + $0x8] sm:$0x3f]
        %v1096 = vld [vmem:[#allocation2 + $0x10] sm:$0x3f]
        %v1097 = vld [vmem:[#allocation2 + $0x18] sm:$0x3f]
        %v1098 = vmul.f32 %v1095, %v713
        %v1099 = vmul.f32 %v1096, %v716
        %v1100 = vmul.f32 %v1097, %v715
        %1104 = vrot.lane.b32.xlu0 %v1098, 111
        %v1105 = vpop.permute.xlu0 %1104
        %1106 = vrot.lane.b32.xlu0 %v1099, 111
        %v1107 = vpop.permute.xlu0 %1106
        %1108 = vrot.lane.b32.xlu0 %v1100, 111
        %v1109 = vpop.permute.xlu0 %1108
        %v1110 = vsel %vm521, %v1105, %v1107
        %v1111 = vsel %vm521, %v1107, %v1109
        %1114 = vst [vmem:[#allocation3 + $0x80] sm:$0x3f] %v1110
        %1115 = vst [vmem:[#allocation3 + $0x88] sm:$0x3f] %v1111
        %v1116 = vld [vmem:[#allocation3] sm:$0xff]
        %v1117 = vld [vmem:[#allocation3 + $0x8] sm:$0xff]
        %v1118 = vld [vmem:[#allocation3 + $0x10] sm:$0xff]
        %v1119 = vld [vmem:[#allocation3 + $0x18] sm:$0xff]
        %v1120 = vld [vmem:[#allocation3 + $0x20] sm:$0xff]
        %v1121 = vld [vmem:[#allocation3 + $0x28] sm:$0xff]
        %v1122 = vld [vmem:[#allocation3 + $0x30] sm:$0xff]
        %v1123 = vld [vmem:[#allocation3 + $0x38] sm:$0xff]
        %v1124 = vld [vmem:[#allocation3 + $0x40] sm:$0xff]
        %v1125 = vld [vmem:[#allocation3 + $0x48] sm:$0xff]
        %v1126 = vld [vmem:[#allocation3 + $0x50] sm:$0xff]
        %v1127 = vld [vmem:[#allocation3 + $0x58] sm:$0xff]
        %v1128 = vld [vmem:[#allocation3 + $0x60] sm:$0xff]
        %v1129 = vld [vmem:[#allocation3 + $0x68] sm:$0xff]
        %v1130 = vld [vmem:[#allocation3 + $0x70] sm:$0xff]
        %v1131 = vld [vmem:[#allocation3 + $0x78] sm:$0xff]
        %v1132 = vld [vmem:[#allocation3 + $0x80] sm:$0xff]
        %v1133 = vld [vmem:[#allocation3 + $0x88] sm:$0xff]
        %1135 = vset.pattern.permute.xlu0 0
        %1136 = vperm.xlu0 %1135, %v948
        %v1137 = vpop.permute.xlu0 %1136
        %1140 = vset.pattern.permute.xlu0 0
        %1141 = vperm.xlu0 %1140, %v949
        %v1142 = vpop.permute.xlu0 %1141
        %v1145 = vsel %vm766, %v945, 0
        %v1148 = vsel %vm766, %v946, 0
        %1150 = vmatprep.subr.mxu0 %v1117
        %1151 = vmatpush1.msra.mxu0 %v1116
        %1152 = vmatprep.subr.mxu0 %v1119
        %1153 = vmatpush1.msra.mxu0 %v1118
        %1154 = vmatprep.subr.mxu0 %v1121
        %1155 = vmatpush1.msra.mxu0 %v1120
        %1156 = vmatprep.subr.mxu0 %v1123
        %1157 = vmatpush1.msra.mxu0 %v1122
        %1158 = vmatprep.subr.mxu0 %v1125
        %1159 = vmatpush1.msra.mxu0 %v1124
        %1160 = vmatprep.subr.mxu0 %v1127
        %1161 = vmatpush1.msra.mxu0 %v1126
        %1162 = vmatprep.subr.mxu0 %v1129
        %1163 = vmatpush1.msra.mxu0 %v1128
        %1164 = vmatprep.subr.mxu0 %v1131
        %1165 = vmatpush1.msra.mxu0 %v1130
        %1166 = vmatprep.subr.mxu0 %v1133
        %1167 = vmatpush1.msra.mxu0 %v1132
        %1168 = vmatprep.subr.mxu0 0.0
        %1169 = vmatpush1.msra.mxu0 0.0
        %1170 = vmatprep.subr.mxu0 0.0
        %1171 = vmatpush1.msra.mxu0 0.0
        %1172 = vmatprep.subr.mxu0 0.0
        %1173 = vmatpush1.msra.mxu0 0.0
        %1174 = vmatprep.subr.mxu0 0.0
        %1175 = vmatpush1.msra.mxu0 0.0
        %1176 = vmatprep.subr.mxu0 0.0
        %1177 = vmatpush1.msra.mxu0 0.0
        %1178 = vmatprep.subr.mxu0 0.0
        %1179 = vmatpush1.msra.mxu0 0.0
        %1180 = vmatprep.subr.mxu0 0.0
        %1181 = vmatpush1.msra.mxu0 0.0
        %1182 = vmatprep.subr.mxu0 0.0
        %1183 = vmatpush1.msra.mxu0 0.0
        %1184 = vmatprep.subr.mxu0 0.0
        %1185 = vmatpush1.msra.mxu0 0.0
        %1186 = vmatprep.subr.mxu0 0.0
        %1187 = vmatpush1.msra.mxu0 0.0
        %1188 = vmatprep.subr.mxu0 0.0
        %1189 = vmatpush1.msra.mxu0 0.0
        %1190 = vmatprep.subr.mxu0 0.0
        %1191 = vmatpush1.msra.mxu0 0.0
        %1192 = vmatprep.subr.mxu0 0.0
        %1193 = vmatpush1.msra.mxu0 0.0
        %1194 = vmatprep.subr.mxu0 0.0
        %1195 = vmatpush1.msra.mxu0 0.0
        %1196 = vmatprep.subr.mxu0 0.0
        %1197 = vmatpush1.msra.mxu0 0.0
        %1198 = vmatprep.subr.mxu0 0.0
        %1199 = vmatpush1.msra.mxu0 0.0
        %1200 = vmatprep.subr.mxu0 0.0
        %1201 = vmatpush1.msra.mxu0 0.0
        %1202 = vmatprep.subr.mxu0 0.0
        %1203 = vmatpush1.msra.mxu0 0.0
        %1204 = vmatprep.subr.mxu0 0.0
        %1205 = vmatpush1.msra.mxu0 0.0
        %1206 = vmatprep.subr.mxu0 0.0
        %1207 = vmatpush1.msra.mxu0 0.0
        %1208 = vmatprep.subr.mxu0 0.0
        %1209 = vmatpush1.msra.mxu0 0.0
        %1210 = vmatprep.subr.mxu0 0.0
        %1211 = vmatpush1.msra.mxu0 0.0
        %1212 = vmatprep.subr.mxu0 0.0
        %1213 = vmatpush1.msra.mxu0 0.0
        %1214 = vmatprep.mubr.f32.mxu0 0.0
        %1215 = vmatmul.mubr.f32.gmra.mrb[0].mxu0 %v1145
        %v1216 = vpop.f32.mrb[0].mxu0
        %v1217 = vadd.f32 %v1137, %v1216
        %v1218 = vpop.f32.mrb[0].mxu0
        %v1219 = vadd.f32 %v1137, %v1218
        %1220 = vmatprep.mubr.f32.mxu0 0.0
        %1221 = vmatmul.mubr.f32.gmra.mrb[0].mxu0 %v1148
        %v1222 = vpop.f32.mrb[0].mxu0
        %v1223 = vadd.f32 %v1142, %v1222
        %v1224 = vpop.f32.mrb[0].mxu0
        %v1225 = vadd.f32 %v1142, %v1224
        %1226 = vdwg.mxu0
        %v1227 = vmul.f32 %v1217, 0.5
        %v1228 = vmul.f32 %v1219, 0.5
        %v1229 = vtanh.pop %v1227
        %v1230 = vtanh.pop %v1228
        %v1231 = vmul.f32 %v1229, 0.5
        %v1232 = vmul.f32 %v1230, 0.5
        %v1233 = vadd.f32 %v1231, 0.5
        %v1234 = vadd.f32 %v1232, 0.5
        %v1235 = vmul.f32 %v1223, 0.5
        %v1236 = vmul.f32 %v1225, 0.5
        %v1237 = vtanh.pop %v1235
        %v1238 = vtanh.pop %v1236
        %v1239 = vmul.f32 %v1237, 0.5
        %v1240 = vmul.f32 %v1238, 0.5
        %v1241 = vadd.f32 %v1239, 0.5
        %v1242 = vadd.f32 %v1240, 0.5
        %v1243 = vtanh.pop %v1223
        %v1244 = vtanh.pop %v1225
        %v1246 = vcombine.high %v918, %v918
        %v1247 = vrot.slane %v918, 5
        %v1248 = vrot.slane %v1246, 5
        %v1251 = vmul.f32 %v1233, %v1247
        %v1252 = vmul.f32 %v1234, %v1248
        %v1255 = vrot.slane %v1243, 1
        %v1256 = vrot.slane %v1244, 1
        %v1259 = vmul.f32 %v1233, %v1255
        %v1260 = vmul.f32 %v1234, %v1256
        %v1263 = vrot.slane %v1259, 5
        %v1264 = vrot.slane %v1260, 5
        %v1267 = vadd.f32 %v1251, %v1263
        %v1268 = vadd.f32 %v1252, %v1264
        %v1269 = vtanh.pop %v1267
        %v1270 = vtanh.pop %v1268
        %v1273 = vrot.slane %v1269, 5
        %v1274 = vrot.slane %v1270, 5
        %v1277 = vmul.f32 %v1233, %v1273
        %v1278 = vmul.f32 %v1234, %v1274
        %v1279 = vmul.f32 %v1241, %v1273
        %v1280 = vmul.f32 %v1242, %v1274
        %v1283 = vcombine.low %v1267, %v1268
        %v1284 = vcombine.high %v1267, %v1268
        %v1285 = vrot.slane %v1283, 7
        %v1286 = vrot.slane %v1285, 4
        %v1287 = vrot.slane %v1284, 7
        %v1288 = vsel %vm910, %v1286, %v1287
        %s1290 = scalar_lea.vmem %s420, 8 [#allocation6]
        %1291 = vst [vmem:[%s1290] sm:$0x77] %v1288
        %v1296 = vrot.slane %v1277, 6
        %v1297 = vrot.slane %v1279, 6
        %v1298 = vsel %vm923, %v1296, %v1297
        %v1299 = vrot.slane %v1278, 6
        %v1300 = vrot.slane %v1280, 6
        %v1301 = vsel %vm923, %v1299, %v1300
        %1304 = vst [vmem:[#allocation2 + $0x8] sm:$0x7] %v1298
        %1305 = vst [vmem:[#allocation2 + $0x10] sm:$0x7] %v1301
        %v1306 = vld [vmem:[%s5] sm:$0x7]
        %v1307 = vld [vmem:[%s6] sm:$0x7]
        %v1308 = vld [vmem:[#allocation2] sm:$0x7]
        %v1309 = vld [vmem:[#allocation2 + $0x8] sm:$0x7]
        %v1310 = vld [vmem:[#allocation2 + $0x10] sm:$0x7]
        %v1311 = vmul.f32 %v1308, %v518
        %v1312 = vmul.f32 %v1309, %v522
        %v1313 = vmul.f32 %v1310, %v520
        %1317 = vrot.lane.b32.xlu0 %v1311, 17
        %v1318 = vpop.permute.xlu0 %1317
        %1319 = vrot.lane.b32.xlu0 %v1312, 17
        %v1320 = vpop.permute.xlu0 %1319
        %1321 = vrot.lane.b32.xlu0 %v1313, 17
        %v1322 = vpop.permute.xlu0 %1321
        %v1323 = vsel %vm538, %v1318, %v1320
        %v1324 = vsel %vm538, %v1320, %v1322
        %1327 = vst [vmem:[#allocation3] sm:$0x7] %v1323
        %1328 = vst [vmem:[#allocation3 + $0x8] sm:$0x7] %v1324
        %v1329 = vld [vmem:[#allocation2] sm:$0x7]
        %v1330 = vld [vmem:[#allocation2 + $0x8] sm:$0x7]
        %v1331 = vld [vmem:[#allocation2 + $0x10] sm:$0x7]
        %1335 = vrot.lane.b32.xlu0 %v1329, 16
        %v1336 = vpop.permute.xlu0 %1335
        %1337 = vrot.lane.b32.xlu0 %v1330, 16
        %v1338 = vpop.permute.xlu0 %1337
        %1339 = vrot.lane.b32.xlu0 %v1331, 16
        %v1340 = vpop.permute.xlu0 %1339
        %v1341 = vsel %vm557, %v1336, %v1338
        %v1342 = vsel %vm557, %v1338, %v1340
        %1345 = vst [vmem:[#allocation3 + $0x10] sm:$0x7] %v1341
        %1346 = vst [vmem:[#allocation3 + $0x18] sm:$0x7] %v1342
        %v1347 = vld [vmem:[#allocation2] sm:$0x7]
        %v1348 = vld [vmem:[#allocation2 + $0x8] sm:$0x7]
        %v1349 = vld [vmem:[#allocation2 + $0x10] sm:$0x7]
        %v1350 = vmul.f32 %v1347, %v570
        %v1351 = vmul.f32 %v1348, %v574
        %v1352 = vmul.f32 %v1349, %v572
        %1356 = vrot.lane.b32.xlu0 %v1350, 15
        %v1357 = vpop.permute.xlu0 %1356
        %1358 = vrot.lane.b32.xlu0 %v1351, 15
        %v1359 = vpop.permute.xlu0 %1358
        %1360 = vrot.lane.b32.xlu0 %v1352, 15
        %v1361 = vpop.permute.xlu0 %1360
        %v1362 = vsel %vm590, %v1357, %v1359
        %v1363 = vsel %vm590, %v1359, %v1361
        %1366 = vst [vmem:[#allocation3 + $0x20] sm:$0x7] %v1362
        %1367 = vst [vmem:[#allocation3 + $0x28] sm:$0x7] %v1363
        %v1368 = vld [vmem:[#allocation2] sm:$0x7]
        %v1369 = vld [vmem:[#allocation2 + $0x8] sm:$0x7]
        %v1370 = vld [vmem:[#allocation2 + $0x10] sm:$0x7]
        %v1371 = vmul.f32 %v1368, %v601
        %v1372 = vmul.f32 %v1369, %v605
        %v1373 = vmul.f32 %v1370, %v603
        %1377 = vrot.lane.b32.xlu0 %v1371, 1
        %v1378 = vpop.permute.xlu0 %1377
        %1379 = vrot.lane.b32.xlu0 %v1372, 1
        %v1380 = vpop.permute.xlu0 %1379
        %1381 = vrot.lane.b32.xlu0 %v1373, 1
        %v1382 = vpop.permute.xlu0 %1381
        %v1383 = vsel %vm621, %v1378, %v1380
        %v1384 = vsel %vm621, %v1380, %v1382
        %1387 = vst [vmem:[#allocation3 + $0x30] sm:$0x7] %v1383
        %1388 = vst [vmem:[#allocation3 + $0x38] sm:$0x7] %v1384
        %v1389 = vld [vmem:[#allocation2 + $0x8] sm:$0x7]
        %v1390 = vld [vmem:[#allocation2 + $0x10] sm:$0x7]
        %1391 = vst [vmem:[#allocation3 + $0x40] sm:$0x7] %v1389
        %1392 = vst [vmem:[#allocation3 + $0x48] sm:$0x7] %v1390
        %v1393 = vld [vmem:[#allocation2 + $0x8] sm:$0x7]
        %v1394 = vld [vmem:[#allocation2 + $0x10] sm:$0x7]
        %v1395 = vld [vmem:[#allocation2 + $0x18] sm:$0x7]
        %v1396 = vmul.f32 %v1393, %v636
        %v1397 = vmul.f32 %v1394, %v639
        %v1398 = vmul.f32 %v1395, %v638
        %1402 = vrot.lane.b32.xlu0 %v1396, 127
        %v1403 = vpop.permute.xlu0 %1402
        %1404 = vrot.lane.b32.xlu0 %v1397, 127
        %v1405 = vpop.permute.xlu0 %1404
        %1406 = vrot.lane.b32.xlu0 %v1398, 127
        %v1407 = vpop.permute.xlu0 %1406
        %v1408 = vsel %vm604, %v1403, %v1405
        %v1409 = vsel %vm604, %v1405, %v1407
        %1412 = vst [vmem:[#allocation3 + $0x50] sm:$0x7] %v1408
        %1413 = vst [vmem:[#allocation3 + $0x58] sm:$0x7] %v1409
        %v1414 = vld [vmem:[#allocation2 + $0x8] sm:$0x7]
        %v1415 = vld [vmem:[#allocation2 + $0x10] sm:$0x7]
        %v1416 = vld [vmem:[#allocation2 + $0x18] sm:$0x7]
        %v1417 = vmul.f32 %v1414, %v665
        %v1418 = vmul.f32 %v1415, %v668
        %v1419 = vmul.f32 %v1416, %v667
        %1423 = vrot.lane.b32.xlu0 %v1417, 113
        %v1424 = vpop.permute.xlu0 %1423
        %1425 = vrot.lane.b32.xlu0 %v1418, 113
        %v1426 = vpop.permute.xlu0 %1425
        %1427 = vrot.lane.b32.xlu0 %v1419, 113
        %v1428 = vpop.permute.xlu0 %1427
        %v1429 = vsel %vm573, %v1424, %v1426
        %v1430 = vsel %vm573, %v1426, %v1428
        %1433 = vst [vmem:[#allocation3 + $0x60] sm:$0x7] %v1429
        %1434 = vst [vmem:[#allocation3 + $0x68] sm:$0x7] %v1430
        %v1435 = vld [vmem:[#allocation2 + $0x8] sm:$0x7]
        %v1436 = vld [vmem:[#allocation2 + $0x10] sm:$0x7]
        %v1437 = vld [vmem:[#allocation2 + $0x18] sm:$0x7]
        %1441 = vrot.lane.b32.xlu0 %v1435, 112
        %v1442 = vpop.permute.xlu0 %1441
        %1443 = vrot.lane.b32.xlu0 %v1436, 112
        %v1444 = vpop.permute.xlu0 %1443
        %1445 = vrot.lane.b32.xlu0 %v1437, 112
        %v1446 = vpop.permute.xlu0 %1445
        %v1447 = vsel %vm702, %v1442, %v1444
        %v1448 = vsel %vm702, %v1444, %v1446
        %1451 = vst [vmem:[#allocation3 + $0x70] sm:$0x7] %v1447
        %1452 = vst [vmem:[#allocation3 + $0x78] sm:$0x7] %v1448
        %v1453 = vld [vmem:[#allocation2 + $0x8] sm:$0x7]
        %v1454 = vld [vmem:[#allocation2 + $0x10] sm:$0x7]
        %v1455 = vld [vmem:[#allocation2 + $0x18] sm:$0x7]
        %v1456 = vmul.f32 %v1453, %v713
        %v1457 = vmul.f32 %v1454, %v716
        %v1458 = vmul.f32 %v1455, %v715
        %1462 = vrot.lane.b32.xlu0 %v1456, 111
        %v1463 = vpop.permute.xlu0 %1462
        %1464 = vrot.lane.b32.xlu0 %v1457, 111
        %v1465 = vpop.permute.xlu0 %1464
        %1466 = vrot.lane.b32.xlu0 %v1458, 111
        %v1467 = vpop.permute.xlu0 %1466
        %v1468 = vsel %vm521, %v1463, %v1465
        %v1469 = vsel %vm521, %v1465, %v1467
        %1472 = vst [vmem:[#allocation3 + $0x80] sm:$0x7] %v1468
        %1473 = vst [vmem:[#allocation3 + $0x88] sm:$0x7] %v1469
        %v1474 = vld [vmem:[#allocation3] sm:$0xff]
        %v1475 = vld [vmem:[#allocation3 + $0x8] sm:$0xff]
        %v1476 = vld [vmem:[#allocation3 + $0x10] sm:$0xff]
        %v1477 = vld [vmem:[#allocation3 + $0x18] sm:$0xff]
        %v1478 = vld [vmem:[#allocation3 + $0x20] sm:$0xff]
        %v1479 = vld [vmem:[#allocation3 + $0x28] sm:$0xff]
        %v1480 = vld [vmem:[#allocation3 + $0x30] sm:$0xff]
        %v1481 = vld [vmem:[#allocation3 + $0x38] sm:$0xff]
        %v1482 = vld [vmem:[#allocation3 + $0x40] sm:$0xff]
        %v1483 = vld [vmem:[#allocation3 + $0x48] sm:$0xff]
        %v1484 = vld [vmem:[#allocation3 + $0x50] sm:$0xff]
        %v1485 = vld [vmem:[#allocation3 + $0x58] sm:$0xff]
        %v1486 = vld [vmem:[#allocation3 + $0x60] sm:$0xff]
        %v1487 = vld [vmem:[#allocation3 + $0x68] sm:$0xff]
        %v1488 = vld [vmem:[#allocation3 + $0x70] sm:$0xff]
        %v1489 = vld [vmem:[#allocation3 + $0x78] sm:$0xff]
        %v1490 = vld [vmem:[#allocation3 + $0x80] sm:$0xff]
        %v1491 = vld [vmem:[#allocation3 + $0x88] sm:$0xff]
        %1493 = vset.pattern.permute.xlu0 0
        %1494 = vperm.xlu0 %1493, %v1307
        %v1495 = vpop.permute.xlu0 %1494
        %v1498 = vsel %vm766, %v1306, 0
        %1500 = vmatprep.subr.mxu0 %v1475
        %1501 = vmatpush1.msra.mxu0 %v1474
        %1502 = vmatprep.subr.mxu0 %v1477
        %1503 = vmatpush1.msra.mxu0 %v1476
        %1504 = vmatprep.subr.mxu0 %v1479
        %1505 = vmatpush1.msra.mxu0 %v1478
        %1506 = vmatprep.subr.mxu0 %v1481
        %1507 = vmatpush1.msra.mxu0 %v1480
        %1508 = vmatprep.subr.mxu0 %v1483
        %1509 = vmatpush1.msra.mxu0 %v1482
        %1510 = vmatprep.subr.mxu0 %v1485
        %1511 = vmatpush1.msra.mxu0 %v1484
        %1512 = vmatprep.subr.mxu0 %v1487
        %1513 = vmatpush1.msra.mxu0 %v1486
        %1514 = vmatprep.subr.mxu0 %v1489
        %1515 = vmatpush1.msra.mxu0 %v1488
        %1516 = vmatprep.subr.mxu0 %v1491
        %1517 = vmatpush1.msra.mxu0 %v1490
        %1518 = vmatprep.subr.mxu0 0.0
        %1519 = vmatpush1.msra.mxu0 0.0
        %1520 = vmatprep.subr.mxu0 0.0
        %1521 = vmatpush1.msra.mxu0 0.0
        %1522 = vmatprep.subr.mxu0 0.0
        %1523 = vmatpush1.msra.mxu0 0.0
        %1524 = vmatprep.subr.mxu0 0.0
        %1525 = vmatpush1.msra.mxu0 0.0
        %1526 = vmatprep.subr.mxu0 0.0
        %1527 = vmatpush1.msra.mxu0 0.0
        %1528 = vmatprep.subr.mxu0 0.0
        %1529 = vmatpush1.msra.mxu0 0.0
        %1530 = vmatprep.subr.mxu0 0.0
        %1531 = vmatpush1.msra.mxu0 0.0
        %1532 = vmatprep.subr.mxu0 0.0
        %1533 = vmatpush1.msra.mxu0 0.0
        %1534 = vmatprep.subr.mxu0 0.0
        %1535 = vmatpush1.msra.mxu0 0.0
        %1536 = vmatprep.subr.mxu0 0.0
        %1537 = vmatpush1.msra.mxu0 0.0
        %1538 = vmatprep.subr.mxu0 0.0
        %1539 = vmatpush1.msra.mxu0 0.0
        %1540 = vmatprep.subr.mxu0 0.0
        %1541 = vmatpush1.msra.mxu0 0.0
        %1542 = vmatprep.subr.mxu0 0.0
        %1543 = vmatpush1.msra.mxu0 0.0
        %1544 = vmatprep.subr.mxu0 0.0
        %1545 = vmatpush1.msra.mxu0 0.0
        %1546 = vmatprep.subr.mxu0 0.0
        %1547 = vmatpush1.msra.mxu0 0.0
        %1548 = vmatprep.subr.mxu0 0.0
        %1549 = vmatpush1.msra.mxu0 0.0
        %1550 = vmatprep.subr.mxu0 0.0
        %1551 = vmatpush1.msra.mxu0 0.0
        %1552 = vmatprep.subr.mxu0 0.0
        %1553 = vmatpush1.msra.mxu0 0.0
        %1554 = vmatprep.subr.mxu0 0.0
        %1555 = vmatpush1.msra.mxu0 0.0
        %1556 = vmatprep.subr.mxu0 0.0
        %1557 = vmatpush1.msra.mxu0 0.0
        %1558 = vmatprep.subr.mxu0 0.0
        %1559 = vmatpush1.msra.mxu0 0.0
        %1560 = vmatprep.subr.mxu0 0.0
        %1561 = vmatpush1.msra.mxu0 0.0
        %1562 = vmatprep.subr.mxu0 0.0
        %1563 = vmatpush1.msra.mxu0 0.0
        %1564 = vmatprep.mubr.f32.mxu0 0.0
        %1565 = vmatmul.mubr.f32.gmra.mrb[0].mxu0 %v1498
        %v1566 = vpop.f32.mrb[0].mxu0
        %v1567 = vadd.f32 %v1495, %v1566
        %v1568 = vpop.f32.mrb[0].mxu0
        %v1569 = vadd.f32 %v1495, %v1568
        %1570 = vdwg.mxu0
        %v1571 = vtanh.pop %v1567
        %v1572 = vtanh.pop %v1569
        %v1575 = vcombine.low %v1571, %v1572
        %1577 = vst [vmem:[%s430] sm:$0x77] %v1575
        %p1578 = scmp.lt.s32.totalorder %s20, 1
        %s1579 = scalar_select %p1578, %s20, 1
        %s1580 = smul.addr %s1579, 2
        %s1581 = smul.addr %s1580, 4
        %s1582 = scalar_lea.vmem %s7, %s1581
        %s1583 = sand.u32 %s216, 1
        %s1584 = sand.u32 %s216, 1
        %s1585 = smul.addr %s1584, 16
        %s1586 = scalar_lea.vmem [#allocation6], %s1585
        // Predicated region
        $region125: #{anime_gan_generator_temporal_forward.1} parent=115 // pred_check
          %p1587 = pneg %p200
        $region126: #{anime_gan_generator_temporal_forward.1} parent=115 // pred_check_branch
          %1589 = sbr.rel (%p1587) target = $region128
        $region127: #{anime_gan_generator_temporal_forward.1} parent=115 // pred_region
          _
        $region128: #{anime_gan_generator_temporal_forward.1} parent=115 // pred_fallthru
          _
        // Predicated region
        $region129: #{anime_gan_generator_temporal_forward.1} parent=115 // pred_check
          %p1590 = pneg %p226
        $region130: #{anime_gan_generator_temporal_forward.1} parent=115 // pred_check_branch
          %1592 = sbr.rel (%p1590) target = $region132
        $region131: #{anime_gan_generator_temporal_forward.1} parent=115 // pred_region
          %s1593 = smul.addr %s20, 2
          %s1594 = smul.addr %s1593, 4
          %s1595 = scalar_lea.vmem %s8, %s1594
          // Predicated region
          $region133: #{anime_gan_generator_temporal_forward.1} parent=131 // pred_check
            _
          $region134: #{anime_gan_generator_temporal_forward.1} parent=131 // pred_check_branch
            %1597 = sbr.rel (0) target = $region136
          $region135: #{anime_gan_generator_temporal_forward.1} parent=131 // pred_region
            // Predicated region
            $region137: #{anime_gan_generator_temporal_forward.1} parent=135 // pred_check
              _
            $region138: #{anime_gan_generator_temporal_forward.1} parent=135 // pred_check_branch
              %1599 = sbr.rel (0) target = $region140
            $region139: #{anime_gan_generator_temporal_forward.1} parent=135 // pred_region
              // Predicated region
              $region152: #{anime_gan_generator_temporal_forward.1} parent=139 // pred_check
                _
              $region153: #{anime_gan_generator_temporal_forward.1} parent=139 // pred_check_branch
                %1616 = sbr.rel (0) target = $region155
              $region154: #{anime_gan_generator_temporal_forward.1} parent=139 // pred_region
                loop: start=0, step=1, limit=1
                $region156: #{anime_gan_generator_temporal_forward.1} parent=154 // loop_pre_header
                  _
                $region157: #{anime_gan_generator_temporal_forward.1} parent=154 // loop_header
                  %s1618 = sphi 0, %s1622
                  %p1619 = scmp.ge.s32.totalorder %s1618, 1
                  %s1623 = sphi %s1586, %s1586
                  %s1624 = sphi %s1595, %s1595
                $region158: #{anime_gan_generator_temporal_forward.1} parent=154 // loop_header_branch
                  %1621 = sbr.rel (%p1619) target = $region162
                $region159: #{anime_gan_generator_temporal_forward.1} parent=154 // loop_body
                  %v1625 = vld [vmem:[%s1623] sm:$0xff]
                  %1626 = vst [vmem:[%s1624] sm:$0xff] %v1625
                  %v1627 = vld [vmem:[%s1623 + $0x8] sm:$0xff]
                  %1628 = vst [vmem:[%s1624 + $0x10] sm:$0xff] %v1627
                $region160: #{anime_gan_generator_temporal_forward.1} parent=154 // loop_footer
                  %s1622 = sadd.s32 1, %s1618
                $region161: #{anime_gan_generator_temporal_forward.1} parent=154 // loop_footer_branch
                  %1617 = sbr.rel target = $region157
                $region162: #{anime_gan_generator_temporal_forward.1} parent=154 // loop_exit
                  _
              $region155: #{anime_gan_generator_temporal_forward.1} parent=139 // pred_fallthru
                _
              // Predicated region
              $region163: #{anime_gan_generator_temporal_forward.1} parent=139 // pred_check
                _
              $region164: #{anime_gan_generator_temporal_forward.1} parent=139 // pred_check_branch
                %1630 = sbr.rel target = $region166
              $region165: #{anime_gan_generator_temporal_forward.1} parent=139 // pred_region
                _
              $region166: #{anime_gan_generator_temporal_forward.1} parent=139 // pred_fallthru
                _
            $region140: #{anime_gan_generator_temporal_forward.1} parent=135 // pred_fallthru
              _
            // Predicated region
            $region141: #{anime_gan_generator_temporal_forward.1} parent=135 // pred_check
              _
            $region142: #{anime_gan_generator_temporal_forward.1} parent=135 // pred_check_branch
              %1601 = sbr.rel target = $region144
            $region143: #{anime_gan_generator_temporal_forward.1} parent=135 // pred_region
              loop: start=0, step=1, limit=1
              $region145: #{anime_gan_generator_temporal_forward.1} parent=143 // loop_pre_header
                _
              $region146: #{anime_gan_generator_temporal_forward.1} parent=143 // loop_header
                %s1604 = sphi 0, %s1608
                %p1605 = scmp.ge.s32.totalorder %s1604, 1
                %s1609 = sphi %s1586, %s1586
                %s1610 = sphi %s1595, %s1595
              $region147: #{anime_gan_generator_temporal_forward.1} parent=143 // loop_header_branch
                %1607 = sbr.rel (%p1605) target = $region151
              $region148: #{anime_gan_generator_temporal_forward.1} parent=143 // loop_body
                %v1611 = vld [vmem:[%s1609] sm:$0xff]
                %1612 = vst [vmem:[%s1610] sm:$0xff] %v1611
                %v1613 = vld [vmem:[%s1609 + $0x8] sm:$0xff]
                %1614 = vst [vmem:[%s1610 + $0x10] sm:$0xff] %v1613
              $region149: #{anime_gan_generator_temporal_forward.1} parent=143 // loop_footer
                %s1608 = sadd.s32 1, %s1604
              $region150: #{anime_gan_generator_temporal_forward.1} parent=143 // loop_footer_branch
                %1603 = sbr.rel target = $region146
              $region151: #{anime_gan_generator_temporal_forward.1} parent=143 // loop_exit
                _
            $region144: #{anime_gan_generator_temporal_forward.1} parent=135 // pred_fallthru
              _
          $region136: #{anime_gan_generator_temporal_forward.1} parent=131 // pred_fallthru
            _
          %1631 = vnop
        $region132: #{anime_gan_generator_temporal_forward.1} parent=115 // pred_fallthru
          _
      $region116: #{anime_gan_generator_temporal_forward.1} parent=5 // pred_fallthru
        _
      %p1632 = scmp.le.s32.totalorder 2, %s15
      // Predicated region
      $region167: #{anime_gan_generator_temporal_forward.1} parent=5 // pred_check
        %p1633 = pneg %p1632
      $region168: #{anime_gan_generator_temporal_forward.1} parent=5 // pred_check_branch
        %1635 = sbr.rel (%p1633) target = $region170
      $region169: #{anime_gan_generator_temporal_forward.1} parent=5 // pred_region
        %s1636 = ssub.s32 %s15, 2
        // Predicated region
        $region171: #{anime_gan_generator_temporal_forward.1} parent=169 // pred_check
          %p1637 = pneg %p206
        $region172: #{anime_gan_generator_temporal_forward.1} parent=169 // pred_check_branch
          %1639 = sbr.rel (%p1637) target = $region174
        $region173: #{anime_gan_generator_temporal_forward.1} parent=169 // pred_region
          %p1640 = scmp.lt.s32.totalorder %s21, 1
          %s1641 = scalar_select %p1640, %s21, 1
          %s1642 = smul.addr %s1641, 2
          %s1643 = smul.addr %s1642, 4
          %s1644 = scalar_lea.vmem %s7, %s1643
        $region174: #{anime_gan_generator_temporal_forward.1} parent=169 // pred_fallthru
          _
        // Predicated region
        $region175: #{anime_gan_generator_temporal_forward.1} parent=169 // pred_check
          %p1645 = pneg %p232
        $region176: #{anime_gan_generator_temporal_forward.1} parent=169 // pred_check_branch
          %1647 = sbr.rel (%p1645) target = $region178
        $region177: #{anime_gan_generator_temporal_forward.1} parent=169 // pred_region
          %s1648 = sand.u32 %s217, 1
          %s1649 = sand.u32 %s217, 1
          %s1650 = smul.addr %s1649, 16
          %s1651 = scalar_lea.vmem [#allocation6], %s1650
        $region178: #{anime_gan_generator_temporal_forward.1} parent=169 // pred_fallthru
          _
      $region170: #{anime_gan_generator_temporal_forward.1} parent=5 // pred_fallthru
        _
    $region6: #{anime_gan_generator_temporal_forward.1} parent=1 // loop_footer
      %s19 = sadd.s32 1, %s15
    $region7: #{anime_gan_generator_temporal_forward.1} parent=1 // loop_footer_branch
      %14 = sbr.rel target = $region3
    $region8: #{anime_gan_generator_temporal_forward.1} parent=1 // loop_exit
      _

</llo_original>
